<compile_context>
chip_gen: v7x
topology: tpu7x:2x2x1
jax: 0.10.0
libtpu: 0.0.40
codegen_flags: <defaults>
</compile_context>

<pallas_src>
import math

import jax
import jax.numpy as jnp
from jax import lax
from jax.experimental import pallas as pl
from jax.experimental.pallas import tpu as pltpu


def _round_up(x, m):
    return ((x + m - 1) // m) * m


def _object_attention_kernel(x_ref, k_ref, v_ref,
                             wp1_ref, bp1_ref, wp2_ref, bp2_ref,
                             wu_ref, bu_ref,
                             out_ref):
    X = x_ref[0]   # (TQ, C)  bf16 pixels: one query tile of one batch item
    K = k_ref[0]   # (M, Kc)  bf16 precomputed f_object(proxy) "keys"
    V = v_ref[0]   # (M, Kc)  bf16 precomputed f_down(proxy)   "values"

    def lin_relu(a_bf16, w_ref, b_ref):
        # 1x1 conv + folded eval-mode BN + ReLU == bf16 matmul (f32 accum) + bias + ReLU
        y = jnp.dot(a_bf16, w_ref[...], preferred_element_type=jnp.float32)
        return jnp.maximum(y + b_ref[...], 0.0)

    bf16 = lambda a: a.astype(jnp.bfloat16)

    # f_pixel(x): (conv1x1+BN+ReLU) x 2 -> query  (Kc^-0.5 folded into layer 2)
    q = lin_relu(bf16(lin_relu(X, wp1_ref, bp1_ref)), wp2_ref, bp2_ref)   # (TQ, Kc) f32

    # sim = (scaled q) @ k^T, contracting the key_channels axes directly.
    sim = lax.dot_general(bf16(q), K,
                          dimension_numbers=(((1,), (1,)), ((), ())),
                          preferred_element_type=jnp.float32)             # (TQ, M)

    # softmax over the (unpadded) proxy axis
    sim = jnp.exp(sim - jnp.max(sim, axis=-1, keepdims=True))
    sim = sim * pl.reciprocal(jnp.sum(sim, axis=-1, keepdims=True), approx=True)

    # context = sim_map @ value -> (TQ, Kc);  f_up(context) -> (TQ, C)
    ctx = jnp.dot(bf16(sim), V, preferred_element_type=jnp.float32)
    out = lin_relu(bf16(ctx), wu_ref, bu_ref)

    out_ref[0] = out.astype(out_ref.dtype)


def object_attention_block(x_nchw, proxy_nchw, params, key_channels, *, tq=512):
    """x_nchw: (N, C, H, W); proxy_nchw: (N, C, Hp, Wp). Returns (N, C, H, W) f32."""
    N, C, H, W = x_nchw.shape
    _, _, Hp, Wp = proxy_nchw.shape
    HW, M = H * W, Hp * Wp
    Kc = key_channels

    (wp1, bp1), (wp2, bp2), (wo1, bo1), (wo2, bo2), (wd, bd), (wu, bu) = params

    # NCHW -> pixel-major (N, pixels, C)
    x = jnp.transpose(x_nchw, (0, 2, 3, 1)).reshape(N, HW, C)
    p = jnp.transpose(proxy_nchw, (0, 2, 3, 1)).reshape(N, M, C)

    # Hoisted: k = f_object(proxy), v = f_down(proxy).  Tiny (N, M, Kc); computed
    # once in f32 by XLA so the kernel never recomputes them per hw tile.
    def lr(a, w, b):
        return jnp.maximum(a @ w + b, 0.0)

    k = lr(lr(p, wo1, bo1), wo2, bo2).astype(jnp.bfloat16)   # (N, M, Kc)
    v = lr(p, wd, bd).astype(jnp.bfloat16)                   # (N, M, Kc)

    # fold key_channels**-0.5 into the second f_pixel layer (ReLU commutes with scale>0)
    scale = key_channels ** (-0.5)
    wp2 = wp2 * scale
    bp2 = bp2 * scale

    # Tile the query (HW) axis; collapse to one tile per batch item when it fits.
    if HW <= tq:
        TQ = _round_up(HW, 16)      # single tile; 16-row aligned for bf16 sublanes
    else:
        TQ = _round_up(tq, 256)     # 256-aligned tiles feed v6e/v7x MXUs fully
    HWp = _round_up(HW, TQ)

    # No channel padding in HBM (block last dim == full array dim is legal);
    # only the query axis is padded up to a whole number of tiles.
    x = jnp.pad(x, ((0, 0), (0, HWp - HW), (0, 0))).astype(jnp.bfloat16)

    weights = [
        wp1.astype(jnp.bfloat16), bp1.astype(jnp.float32),
        wp2.astype(jnp.bfloat16), bp2.astype(jnp.float32),
        wu.astype(jnp.bfloat16), bu.astype(jnp.float32),
    ]

    x_spec = pl.BlockSpec((1, TQ, C), lambda b, t: (b, t, 0))
    k_spec = pl.BlockSpec((1, M, Kc), lambda b, t: (b, 0, 0))
    v_spec = pl.BlockSpec((1, M, Kc), lambda b, t: (b, 0, 0))
    w_specs = [pl.BlockSpec(w.shape, lambda b, t: (0, 0)) for w in weights]

    out = pl.pallas_call(
        _object_attention_kernel,
        out_shape=jax.ShapeDtypeStruct((N, HWp, C), jnp.bfloat16),
        grid_spec=pltpu.PrefetchScalarGridSpec(
            num_scalar_prefetch=0,
            grid=(N, HWp // TQ),
            in_specs=[x_spec, k_spec, v_spec] + w_specs,
            out_specs=pl.BlockSpec((1, TQ, C), lambda b, t: (b, t, 0)),
        ),
        compiler_params=pltpu.CompilerParams(
            dimension_semantics=("parallel", "parallel")),
    )(x, k, v, *weights)

    # strip query padding, back to NCHW f32
    out = out[:, :HW, :].astype(jnp.float32).reshape(N, H, W, C)
    return jnp.transpose(out, (0, 3, 1, 2))


def _make_folded_linear(key, c_in, c_out, eps=1e-5):
    """Deterministic conv1x1 weight + eval-mode BN folded to (W_eff, b_eff).

    Returns weight of shape (c_in, c_out) (pixel-major convention) and bias (1, c_out).
    """
    k1, k2, k3, k4, k5 = jax.random.split(key, 5)
    w = jax.random.normal(k1, (c_in, c_out), jnp.float32) * (1.0 / math.sqrt(c_in))
    gamma = 1.0 + 0.1 * jax.random.normal(k2, (c_out,), jnp.float32)
    beta = 0.1 * jax.random.normal(k3, (c_out,), jnp.float32)
    running_mean = 0.1 * jax.random.normal(k4, (c_out,), jnp.float32)
    running_var = jnp.abs(jax.random.normal(k5, (c_out,), jnp.float32)) + 0.5
    scale = gamma / jnp.sqrt(running_var + eps)
    w_eff = w * scale[None, :]
    b_eff = beta - running_mean * scale
    return w_eff, b_eff.reshape(1, c_out)


def _reference_forward(x_nchw, proxy_nchw, params, key_channels):
    """Pure-JAX f32 reference mirroring the PyTorch forward (scale=1, eval-mode BN)."""
    N, C, H, W = x_nchw.shape
    _, _, Hp, Wp = proxy_nchw.shape
    x = jnp.transpose(x_nchw, (0, 2, 3, 1)).reshape(N, H * W, C)
    p = jnp.transpose(proxy_nchw, (0, 2, 3, 1)).reshape(N, Hp * Wp, C)
    (wp1, bp1), (wp2, bp2), (wo1, bo1), (wo2, bo2), (wd, bd), (wu, bu) = params

    def lr(a, w, b):
        return jnp.maximum(a @ w + b, 0.0)

    q = lr(lr(x, wp1, bp1), wp2, bp2)          # (N, HW, Kc)
    k = lr(lr(p, wo1, bo1), wo2, bo2)          # (N, M, Kc)
    v = lr(p, wd, bd)                          # (N, M, Kc)
    sim = jnp.einsum('nqc,nkc->nqk', q, k) * (key_channels ** -0.5)
    sim = jax.nn.softmax(sim, axis=-1)
    ctx = jnp.einsum('nqk,nkc->nqc', sim, v)   # (N, HW, Kc)
    out = lr(ctx, wu, bu)                      # (N, HW, C)
    return jnp.transpose(out.reshape(N, H, W, C), (0, 3, 1, 2))


if __name__ == "__main__":
    in_channels = 16
    key_channels = 32
    N, H, W = 2, 16, 16      # x: (2, 16, 16, 16) in NCHW
    Hp, Wp = 8, 1            # proxy: (2, 16, 8, 1)  (K=8 object regions)

    root = jax.random.PRNGKey(0)
    kx, kp, k1, k2, k3, k4, k5, k6 = jax.random.split(root, 8)

    x = jax.random.normal(kx, (N, in_channels, H, W), jnp.float32)
    proxy = jax.random.normal(kp, (N, in_channels, Hp, Wp), jnp.float32)

    params = (
        _make_folded_linear(k1, in_channels, key_channels),   # f_pixel conv1 + BN
        _make_folded_linear(k2, key_channels, key_channels),  # f_pixel conv2 + BN
        _make_folded_linear(k3, in_channels, key_channels),   # f_object conv1 + BN
        _make_folded_linear(k4, key_channels, key_channels),  # f_object conv2 + BN
        _make_folded_linear(k5, in_channels, key_channels),   # f_down conv + BN
        _make_folded_linear(k6, key_channels, in_channels),   # f_up conv + BN
    )

    out = object_attention_block(x, proxy, params, key_channels)
    out = jax.block_until_ready(out)

    ref = jax.block_until_ready(_reference_forward(x, proxy, params, key_channels))
    assert out.shape == (N, in_channels, H, W)
    # bf16 MXU operands / bf16 output vs f32 reference -> loosened tolerance
    assert jnp.allclose(out, ref, rtol=5e-2, atol=5e-2), "mismatch vs JAX reference"

    print("KERNEL_OK")
</pallas_src>

<mosaic_0001>
module attributes {stable_mosaic.version = 11 : i64} {
  func.func @_object_attention_kernel(%arg0: i32, %arg1: i32, %arg2: memref<1x256x16xbf16, #tpu.memory_space<vmem>>, %arg3: memref<1x8x32xbf16, #tpu.memory_space<vmem>>, %arg4: memref<1x8x32xbf16, #tpu.memory_space<vmem>>, %arg5: memref<16x32xbf16, #tpu.memory_space<vmem>>, %arg6: memref<1x32xf32, #tpu.memory_space<vmem>>, %arg7: memref<32x32xbf16, #tpu.memory_space<vmem>>, %arg8: memref<1x32xf32, #tpu.memory_space<vmem>>, %arg9: memref<32x16xbf16, #tpu.memory_space<vmem>>, %arg10: memref<1x16xf32, #tpu.memory_space<vmem>>, %arg11: memref<1x256x16xbf16, #tpu.memory_space<vmem>>) attributes {dimension_semantics = [#tpu.dimension_semantics<parallel>, #tpu.dimension_semantics<parallel>], iteration_bounds = array<i64: 2, 1>, scalar_prefetch = 0 : i64, scratch_operands = 0 : i64, tpu.core_type = #tpu.core_type<tc>, window_params = [{transform_indices = @transform_0, window_bounds = array<i64: 1, 256, 16>}, {transform_indices = @transform_1, window_bounds = array<i64: 1, 8, 32>}, {transform_indices = @transform_2, window_bounds = array<i64: 1, 8, 32>}, {pipeline_mode = #tpu.pipeline_mode<synchronous>, transform_indices = @transform_3, window_bounds = array<i64: 16, 32>}, {pipeline_mode = #tpu.pipeline_mode<synchronous>, transform_indices = @transform_4, window_bounds = array<i64: 1, 32>}, {pipeline_mode = #tpu.pipeline_mode<synchronous>, transform_indices = @transform_5, window_bounds = array<i64: 32, 32>}, {pipeline_mode = #tpu.pipeline_mode<synchronous>, transform_indices = @transform_6, window_bounds = array<i64: 1, 32>}, {pipeline_mode = #tpu.pipeline_mode<synchronous>, transform_indices = @transform_7, window_bounds = array<i64: 32, 16>}, {pipeline_mode = #tpu.pipeline_mode<synchronous>, transform_indices = @transform_8, window_bounds = array<i64: 1, 16>}, {transform_indices = @transform_9, window_bounds = array<i64: 1, 256, 16>}]} {
    %c0 = arith.constant 0 : index
    %c0_0 = arith.constant 0 : index
    %c0_1 = arith.constant 0 : index
    %0 = vector.load %arg2[%c0, %c0_0, %c0_1] : memref<1x256x16xbf16, #tpu.memory_space<vmem>>, vector<1x256x16xbf16>
    %1 = vector.shape_cast %0 : vector<1x256x16xbf16> to vector<256x16xbf16>
    %c0_2 = arith.constant 0 : index
    %c0_3 = arith.constant 0 : index
    %c0_4 = arith.constant 0 : index
    %2 = vector.load %arg3[%c0_2, %c0_3, %c0_4] : memref<1x8x32xbf16, #tpu.memory_space<vmem>>, vector<1x8x32xbf16>
    %3 = vector.shape_cast %2 : vector<1x8x32xbf16> to vector<8x32xbf16>
    %c0_5 = arith.constant 0 : index
    %c0_6 = arith.constant 0 : index
    %c0_7 = arith.constant 0 : index
    %4 = vector.load %arg4[%c0_5, %c0_6, %c0_7] : memref<1x8x32xbf16, #tpu.memory_space<vmem>>, vector<1x8x32xbf16>
    %5 = vector.shape_cast %4 : vector<1x8x32xbf16> to vector<8x32xbf16>
    %c0_8 = arith.constant 0 : index
    %c0_9 = arith.constant 0 : index
    %6 = vector.load %arg5[%c0_8, %c0_9] : memref<16x32xbf16, #tpu.memory_space<vmem>>, vector<16x32xbf16>
    %cst = arith.constant dense<0.000000e+00> : vector<256x32xf32>
    %7 = tpu.matmul %1, %6, %cst {dimension_numbers = #tpu.dot_dimension_numbers<[1], [0], [0], [1], [0, 0, 1, 1], [], []>} : vector<256x16xbf16>, vector<16x32xbf16>, vector<256x32xf32> -> vector<256x32xf32>
    %c0_10 = arith.constant 0 : index
    %c0_11 = arith.constant 0 : index
    %8 = vector.load %arg6[%c0_10, %c0_11] : memref<1x32xf32, #tpu.memory_space<vmem>>, vector<1x32xf32>
    %9 = vector.broadcast %8 : vector<1x32xf32> to vector<256x32xf32>
    %10 = arith.addf %7, %9 : vector<256x32xf32>
    %cst_12 = arith.constant 0.000000e+00 : f32
    %11 = vector.broadcast %cst_12 : f32 to vector<256x32xf32>
    %12 = arith.maximumf %10, %11 : vector<256x32xf32>
    %13 = arith.truncf %12 : vector<256x32xf32> to vector<256x32xbf16>
    %c0_13 = arith.constant 0 : index
    %c0_14 = arith.constant 0 : index
    %14 = vector.load %arg7[%c0_13, %c0_14] : memref<32x32xbf16, #tpu.memory_space<vmem>>, vector<32x32xbf16>
    %cst_15 = arith.constant dense<0.000000e+00> : vector<256x32xf32>
    %15 = tpu.matmul %13, %14, %cst_15 {dimension_numbers = #tpu.dot_dimension_numbers<[1], [0], [0], [1], [0, 0, 1, 1], [], []>} : vector<256x32xbf16>, vector<32x32xbf16>, vector<256x32xf32> -> vector<256x32xf32>
    %c0_16 = arith.constant 0 : index
    %c0_17 = arith.constant 0 : index
    %16 = vector.load %arg8[%c0_16, %c0_17] : memref<1x32xf32, #tpu.memory_space<vmem>>, vector<1x32xf32>
    %17 = vector.broadcast %16 : vector<1x32xf32> to vector<256x32xf32>
    %18 = arith.addf %15, %17 : vector<256x32xf32>
    %cst_18 = arith.constant 0.000000e+00 : f32
    %19 = vector.broadcast %cst_18 : f32 to vector<256x32xf32>
    %20 = arith.maximumf %18, %19 : vector<256x32xf32>
    %21 = arith.truncf %20 : vector<256x32xf32> to vector<256x32xbf16>
    %cst_19 = arith.constant dense<0.000000e+00> : vector<256x8xf32>
    %22 = tpu.matmul %21, %3, %cst_19 {dimension_numbers = #tpu.dot_dimension_numbers<[1], [1], [0], [0], [0, 0, 1, 0], [], []>} : vector<256x32xbf16>, vector<8x32xbf16>, vector<256x8xf32> -> vector<256x8xf32>
    %cst_20 = arith.constant dense<0xFF800000> : vector<256xf32>
    %23 = vector.multi_reduction <maximumf>, %22, %cst_20 [1] : vector<256x8xf32> to vector<256xf32>
    %24 = vector.shape_cast %23 : vector<256xf32> to vector<256x1xf32>
    %25 = vector.broadcast %24 : vector<256x1xf32> to vector<256x8xf32>
    %26 = arith.subf %22, %25 : vector<256x8xf32>
    %27 = math.exp %26 : vector<256x8xf32>
    %cst_21 = arith.constant dense<0.000000e+00> : vector<256xf32>
    %28 = vector.multi_reduction <add>, %27, %cst_21 [1] : vector<256x8xf32> to vector<256xf32>
    %29 = vector.shape_cast %28 : vector<256xf32> to vector<256x1xf32>
    %30 = tpu.reciprocal %29 {approx = true} : vector<256x1xf32> -> vector<256x1xf32>
    %31 = vector.broadcast %30 : vector<256x1xf32> to vector<256x8xf32>
    %32 = arith.mulf %27, %31 : vector<256x8xf32>
    %33 = arith.truncf %32 : vector<256x8xf32> to vector<256x8xbf16>
    %cst_22 = arith.constant dense<0.000000e+00> : vector<256x32xf32>
    %34 = tpu.matmul %33, %5, %cst_22 {dimension_numbers = #tpu.dot_dimension_numbers<[1], [0], [0], [1], [0, 0, 1, 1], [], []>} : vector<256x8xbf16>, vector<8x32xbf16>, vector<256x32xf32> -> vector<256x32xf32>
    %35 = arith.truncf %34 : vector<256x32xf32> to vector<256x32xbf16>
    %c0_23 = arith.constant 0 : index
    %c0_24 = arith.constant 0 : index
    %36 = vector.load %arg9[%c0_23, %c0_24] : memref<32x16xbf16, #tpu.memory_space<vmem>>, vector<32x16xbf16>
    %cst_25 = arith.constant dense<0.000000e+00> : vector<256x16xf32>
    %37 = tpu.matmul %35, %36, %cst_25 {dimension_numbers = #tpu.dot_dimension_numbers<[1], [0], [0], [1], [0, 0, 1, 1], [], []>} : vector<256x32xbf16>, vector<32x16xbf16>, vector<256x16xf32> -> vector<256x16xf32>
    %c0_26 = arith.constant 0 : index
    %c0_27 = arith.constant 0 : index
    %38 = vector.load %arg10[%c0_26, %c0_27] : memref<1x16xf32, #tpu.memory_space<vmem>>, vector<1x16xf32>
    %39 = vector.broadcast %38 : vector<1x16xf32> to vector<256x16xf32>
    %40 = arith.addf %37, %39 : vector<256x16xf32>
    %cst_28 = arith.constant 0.000000e+00 : f32
    %41 = vector.broadcast %cst_28 : f32 to vector<256x16xf32>
    %42 = arith.maximumf %40, %41 : vector<256x16xf32>
    %43 = arith.truncf %42 : vector<256x16xf32> to vector<256x16xbf16>
    %c0_29 = arith.constant 0 : index
    %c0_30 = arith.constant 0 : index
    %c0_31 = arith.constant 0 : index
    %44 = vector.load %arg11[%c0_29, %c0_30, %c0_31] : memref<1x256x16xbf16, #tpu.memory_space<vmem>>, vector<1x256x16xbf16>
    %45 = vector.shape_cast %44 : vector<1x256x16xbf16> to vector<256x16xbf16>
    %46 = vector.shape_cast %43 : vector<256x16xbf16> to vector<1x256x16xbf16>
    tpu.vector_store %arg11[%c0_29, %c0_30, %c0_31], %46 {strides = array<i32>} : memref<1x256x16xbf16, #tpu.memory_space<vmem>>, vector<1x256x16xbf16>,
    return
  }
  func.func @transform_0(%arg0: i32, %arg1: i32) -> (i32, i32, i32) {
    %c0_i32 = arith.constant 0 : i32
    %c0_i32_0 = arith.constant 0 : i32
    return %arg0, %arg1, %c0_i32 : i32, i32, i32
  }
  func.func @transform_1(%arg0: i32, %arg1: i32) -> (i32, i32, i32) {
    %c0_i32 = arith.constant 0 : i32
    %c0_i32_0 = arith.constant 0 : i32
    %c0_i32_1 = arith.constant 0 : i32
    return %arg0, %c0_i32, %c0_i32_0 : i32, i32, i32
  }
  func.func @transform_2(%arg0: i32, %arg1: i32) -> (i32, i32, i32) {
    %c0_i32 = arith.constant 0 : i32
    %c0_i32_0 = arith.constant 0 : i32
    %c0_i32_1 = arith.constant 0 : i32
    return %arg0, %c0_i32, %c0_i32_0 : i32, i32, i32
  }
  func.func @transform_3(%arg0: i32, %arg1: i32) -> (i32, i32) {
    %c0_i32 = arith.constant 0 : i32
    %c0_i32_0 = arith.constant 0 : i32
    %c0_i32_1 = arith.constant 0 : i32
    return %c0_i32, %c0_i32_0 : i32, i32
  }
  func.func @transform_4(%arg0: i32, %arg1: i32) -> (i32, i32) {
    %c0_i32 = arith.constant 0 : i32
    %c0_i32_0 = arith.constant 0 : i32
    %c0_i32_1 = arith.constant 0 : i32
    return %c0_i32, %c0_i32_0 : i32, i32
  }
  func.func @transform_5(%arg0: i32, %arg1: i32) -> (i32, i32) {
    %c0_i32 = arith.constant 0 : i32
    %c0_i32_0 = arith.constant 0 : i32
    %c0_i32_1 = arith.constant 0 : i32
    return %c0_i32, %c0_i32_0 : i32, i32
  }
  func.func @transform_6(%arg0: i32, %arg1: i32) -> (i32, i32) {
    %c0_i32 = arith.constant 0 : i32
    %c0_i32_0 = arith.constant 0 : i32
    %c0_i32_1 = arith.constant 0 : i32
    return %c0_i32, %c0_i32_0 : i32, i32
  }
  func.func @transform_7(%arg0: i32, %arg1: i32) -> (i32, i32) {
    %c0_i32 = arith.constant 0 : i32
    %c0_i32_0 = arith.constant 0 : i32
    %c0_i32_1 = arith.constant 0 : i32
    return %c0_i32, %c0_i32_0 : i32, i32
  }
  func.func @transform_8(%arg0: i32, %arg1: i32) -> (i32, i32) {
    %c0_i32 = arith.constant 0 : i32
    %c0_i32_0 = arith.constant 0 : i32
    %c0_i32_1 = arith.constant 0 : i32
    return %c0_i32, %c0_i32_0 : i32, i32
  }
  func.func @transform_9(%arg0: i32, %arg1: i32) -> (i32, i32, i32) {
    %c0_i32 = arith.constant 0 : i32
    %c0_i32_0 = arith.constant 0 : i32
    return %arg0, %arg1, %c0_i32 : i32, i32, i32
  }
}

</mosaic_0001>

<llo_original>
// kernel: tpu_custom_call.1
$region0: #{tpu_custom_call.1}
  #allocation0 [shape = 'u32[]', space=smem, size = 0x4, offset = 0x4, fixed_abs, tag = 'smem constant byte address 0x4 - core index']
  #allocation1 [shape = 'u32[144,128]{1,0:T(1,128)}', space=vmem, size = 0x12000, scoped, tag = 'internal scratch']
  %s0 = inlined_call_operand.vmem [shape: bf16[2,256,16], index: 0, kind: input, shape index: {}]
  %s1 = inlined_call_operand.vmem [shape: bf16[2,8,32], index: 1, kind: input, shape index: {}]
  %s2 = inlined_call_operand.vmem [shape: bf16[2,8,32], index: 2, kind: input, shape index: {}]
  %s3 = inlined_call_operand.vmem [shape: bf16[16,32], index: 3, kind: input, shape index: {}]
  %s4 = inlined_call_operand.vmem [shape: f32[1,32], index: 4, kind: input, shape index: {}]
  %s5 = inlined_call_operand.vmem [shape: bf16[32,32], index: 5, kind: input, shape index: {}]
  %s6 = inlined_call_operand.vmem [shape: f32[1,32], index: 6, kind: input, shape index: {}]
  %s7 = inlined_call_operand.vmem [shape: bf16[32,16], index: 7, kind: input, shape index: {}]
  %s8 = inlined_call_operand.vmem [shape: f32[1,16], index: 8, kind: input, shape index: {}]
  %s9 = inlined_call_operand.vmem [shape: bf16[2,256,16], index: 9, kind: output, shape index: {}]
  %s10 = sld [smem:[#allocation0]]
  $region69: #{tpu_custom_call.1} parent=0
    _
  %s12 = ssub.s32 1, %s10
  %s13 = scalar_select 0, %s12, %s10
  loop: start=0, step=1, limit=4
  $region2: #{tpu_custom_call.1} parent=0 // loop_pre_header
    _
  $region3: #{tpu_custom_call.1} parent=0 // loop_header
    %s15 = sphi 0, %s19
    %p16 = scmp.ge.s32.totalorder %s15, 4
    %s22 = sphi 0, %s34
    %s23 = sphi 0, %s30
    %s24 = sphi 0, %s22
    %s25 = sphi 0, %s23
    %s26 = sphi 0, %s24
    %s27 = sphi 0, %s25
    %s39 = sphi 0, %s41
    %s42 = sphi 0, %s39
    %s43 = sphi 0, %s42
    %s59 = sphi 0, %s43
    %s65 = sphi 0, %s67
    %s68 = sphi 0, %s65
    %s69 = sphi 0, %s68
    %s85 = sphi 0, %s69
    %s91 = sphi 0, %s93
    %s94 = sphi 0, %s91
    %s95 = sphi 0, %s94
    %s111 = sphi 0, %s95
    %s115 = sphi 0, %s115
    %s117 = sphi 0, %s115
    %s118 = sphi 0, %s117
    %s132 = sphi 0, %s118
    %s136 = sphi 0, %s136
    %s138 = sphi 0, %s136
    %s139 = sphi 0, %s138
    %s153 = sphi 0, %s139
    %s157 = sphi 0, %s157
    %s159 = sphi 0, %s157
    %s160 = sphi 0, %s159
    %s174 = sphi 0, %s160
    %s178 = sphi 0, %s178
    %s180 = sphi 0, %s178
    %s181 = sphi 0, %s180
    %s195 = sphi 0, %s181
    %s199 = sphi 0, %s199
    %s201 = sphi 0, %s199
    %s202 = sphi 0, %s201
    %s216 = sphi 0, %s202
    %s220 = sphi 0, %s220
    %s222 = sphi 0, %s220
    %s223 = sphi 0, %s222
    %s237 = sphi 0, %s223
    %s245 = sphi 0, %s247
    %s248 = sphi 0, %s245
    %s249 = sphi 0, %s248
    %s265 = sphi 0, %s249
  $region4: #{tpu_custom_call.1} parent=0 // loop_header_branch
    %18 = sbr.rel (%p16) target = $region8
  $region5: #{tpu_custom_call.1} parent=0 // loop_body
    %s20 = ssub.s32 %s15, 1
    %s21 = ssub.s32 %s15, 2
    %s28 = sadd.s32 1, %s23
    %p29 = scmp.ge.s32.totalorder %s28, 1
    %s30 = scalar_select %p29, 0, %s28
    %s31 = sadd.s32 1, %s22
    %s32 = scalar_select %p29, %s31, %s22
    %p33 = scmp.ge.s32.totalorder %s32, 2
    %s34 = scalar_select %p33, 0, %s32
    %s35 = ssub.s32 %s22, %s34
    %s36 = ssub.s32 %s23, %s30
    %s37 = sor.u32 %s35, %s36
    %p38 = scmp.eq.s32.totalorder %s37, 0
    %s40 = sadd.s32 %s39, 1
    %s41 = scalar_select %p38, %s39, %s40
    %p44 = pneg %p38
    %p45 = scmp.eq.s32.totalorder %s15, 1
    %p46 = por %p44, %p45
    %p47 = scmp.ne.s32.totalorder %s39, %s42
    %p48 = scmp.eq.s32.totalorder %s15, 0
    %p49 = por %p47, %p48
    %p50 = scmp.ne.s32.totalorder %s39, %s42
    %p51 = scmp.eq.s32.totalorder %s20, 1
    %p52 = por %p50, %p51
    %p53 = scmp.ne.s32.totalorder %s42, %s43
    %p54 = scmp.eq.s32.totalorder %s20, 0
    %p55 = por %p53, %p54
    %p56 = scmp.ne.s32.totalorder %s42, %s43
    %p57 = scmp.eq.s32.totalorder %s21, 1
    %p58 = por %p56, %p57
    %p60 = scmp.ne.s32.totalorder %s43, %s59
    %p61 = scmp.eq.s32.totalorder %s21, 0
    %p62 = por %p60, %p61
    %s63 = ssub.s32 %s22, %s34
    %p64 = scmp.eq.s32.totalorder %s63, 0
    %s66 = sadd.s32 %s65, 1
    %s67 = scalar_select %p64, %s65, %s66
    %p70 = pneg %p64
    %p71 = scmp.eq.s32.totalorder %s15, 1
    %p72 = por %p70, %p71
    %p73 = scmp.ne.s32.totalorder %s65, %s68
    %p74 = scmp.eq.s32.totalorder %s15, 0
    %p75 = por %p73, %p74
    %p76 = scmp.ne.s32.totalorder %s65, %s68
    %p77 = scmp.eq.s32.totalorder %s20, 1
    %p78 = por %p76, %p77
    %p79 = scmp.ne.s32.totalorder %s68, %s69
    %p80 = scmp.eq.s32.totalorder %s20, 0
    %p81 = por %p79, %p80
    %p82 = scmp.ne.s32.totalorder %s68, %s69
    %p83 = scmp.eq.s32.totalorder %s21, 1
    %p84 = por %p82, %p83
    %p86 = scmp.ne.s32.totalorder %s69, %s85
    %p87 = scmp.eq.s32.totalorder %s21, 0
    %p88 = por %p86, %p87
    %s89 = ssub.s32 %s22, %s34
    %p90 = scmp.eq.s32.totalorder %s89, 0
    %s92 = sadd.s32 %s91, 1
    %s93 = scalar_select %p90, %s91, %s92
    %p96 = pneg %p90
    %p97 = scmp.eq.s32.totalorder %s15, 1
    %p98 = por %p96, %p97
    %p99 = scmp.ne.s32.totalorder %s91, %s94
    %p100 = scmp.eq.s32.totalorder %s15, 0
    %p101 = por %p99, %p100
    %p102 = scmp.ne.s32.totalorder %s91, %s94
    %p103 = scmp.eq.s32.totalorder %s20, 1
    %p104 = por %p102, %p103
    %p105 = scmp.ne.s32.totalorder %s94, %s95
    %p106 = scmp.eq.s32.totalorder %s20, 0
    %p107 = por %p105, %p106
    %p108 = scmp.ne.s32.totalorder %s94, %s95
    %p109 = scmp.eq.s32.totalorder %s21, 1
    %p110 = por %p108, %p109
    %p112 = scmp.ne.s32.totalorder %s95, %s111
    %p113 = scmp.eq.s32.totalorder %s21, 0
    %p114 = por %p112, %p113
    %s116 = sadd.s32 %s115, 1
    %p119 = scmp.eq.s32.totalorder %s15, 1
    %p120 = scmp.ne.s32.totalorder %s115, %s117
    %p121 = scmp.eq.s32.totalorder %s15, 0
    %p122 = por %p120, %p121
    %p123 = scmp.ne.s32.totalorder %s115, %s117
    %p124 = scmp.eq.s32.totalorder %s20, 1
    %p125 = por %p123, %p124
    %p126 = scmp.ne.s32.totalorder %s117, %s118
    %p127 = scmp.eq.s32.totalorder %s20, 0
    %p128 = por %p126, %p127
    %p129 = scmp.ne.s32.totalorder %s117, %s118
    %p130 = scmp.eq.s32.totalorder %s21, 1
    %p131 = por %p129, %p130
    %p133 = scmp.ne.s32.totalorder %s118, %s132
    %p134 = scmp.eq.s32.totalorder %s21, 0
    %p135 = por %p133, %p134
    %s137 = sadd.s32 %s136, 1
    %p140 = scmp.eq.s32.totalorder %s15, 1
    %p141 = scmp.ne.s32.totalorder %s136, %s138
    %p142 = scmp.eq.s32.totalorder %s15, 0
    %p143 = por %p141, %p142
    %p144 = scmp.ne.s32.totalorder %s136, %s138
    %p145 = scmp.eq.s32.totalorder %s20, 1
    %p146 = por %p144, %p145
    %p147 = scmp.ne.s32.totalorder %s138, %s139
    %p148 = scmp.eq.s32.totalorder %s20, 0
    %p149 = por %p147, %p148
    %p150 = scmp.ne.s32.totalorder %s138, %s139
    %p151 = scmp.eq.s32.totalorder %s21, 1
    %p152 = por %p150, %p151
    %p154 = scmp.ne.s32.totalorder %s139, %s153
    %p155 = scmp.eq.s32.totalorder %s21, 0
    %p156 = por %p154, %p155
    %s158 = sadd.s32 %s157, 1
    %p161 = scmp.eq.s32.totalorder %s15, 1
    %p162 = scmp.ne.s32.totalorder %s157, %s159
    %p163 = scmp.eq.s32.totalorder %s15, 0
    %p164 = por %p162, %p163
    %p165 = scmp.ne.s32.totalorder %s157, %s159
    %p166 = scmp.eq.s32.totalorder %s20, 1
    %p167 = por %p165, %p166
    %p168 = scmp.ne.s32.totalorder %s159, %s160
    %p169 = scmp.eq.s32.totalorder %s20, 0
    %p170 = por %p168, %p169
    %p171 = scmp.ne.s32.totalorder %s159, %s160
    %p172 = scmp.eq.s32.totalorder %s21, 1
    %p173 = por %p171, %p172
    %p175 = scmp.ne.s32.totalorder %s160, %s174
    %p176 = scmp.eq.s32.totalorder %s21, 0
    %p177 = por %p175, %p176
    %s179 = sadd.s32 %s178, 1
    %p182 = scmp.eq.s32.totalorder %s15, 1
    %p183 = scmp.ne.s32.totalorder %s178, %s180
    %p184 = scmp.eq.s32.totalorder %s15, 0
    %p185 = por %p183, %p184
    %p186 = scmp.ne.s32.totalorder %s178, %s180
    %p187 = scmp.eq.s32.totalorder %s20, 1
    %p188 = por %p186, %p187
    %p189 = scmp.ne.s32.totalorder %s180, %s181
    %p190 = scmp.eq.s32.totalorder %s20, 0
    %p191 = por %p189, %p190
    %p192 = scmp.ne.s32.totalorder %s180, %s181
    %p193 = scmp.eq.s32.totalorder %s21, 1
    %p194 = por %p192, %p193
    %p196 = scmp.ne.s32.totalorder %s181, %s195
    %p197 = scmp.eq.s32.totalorder %s21, 0
    %p198 = por %p196, %p197
    %s200 = sadd.s32 %s199, 1
    %p203 = scmp.eq.s32.totalorder %s15, 1
    %p204 = scmp.ne.s32.totalorder %s199, %s201
    %p205 = scmp.eq.s32.totalorder %s15, 0
    %p206 = por %p204, %p205
    %p207 = scmp.ne.s32.totalorder %s199, %s201
    %p208 = scmp.eq.s32.totalorder %s20, 1
    %p209 = por %p207, %p208
    %p210 = scmp.ne.s32.totalorder %s201, %s202
    %p211 = scmp.eq.s32.totalorder %s20, 0
    %p212 = por %p210, %p211
    %p213 = scmp.ne.s32.totalorder %s201, %s202
    %p214 = scmp.eq.s32.totalorder %s21, 1
    %p215 = por %p213, %p214
    %p217 = scmp.ne.s32.totalorder %s202, %s216
    %p218 = scmp.eq.s32.totalorder %s21, 0
    %p219 = por %p217, %p218
    %s221 = sadd.s32 %s220, 1
    %p224 = scmp.eq.s32.totalorder %s15, 1
    %p225 = scmp.ne.s32.totalorder %s220, %s222
    %p226 = scmp.eq.s32.totalorder %s15, 0
    %p227 = por %p225, %p226
    %p228 = scmp.ne.s32.totalorder %s220, %s222
    %p229 = scmp.eq.s32.totalorder %s20, 1
    %p230 = por %p228, %p229
    %p231 = scmp.ne.s32.totalorder %s222, %s223
    %p232 = scmp.eq.s32.totalorder %s20, 0
    %p233 = por %p231, %p232
    %p234 = scmp.ne.s32.totalorder %s222, %s223
    %p235 = scmp.eq.s32.totalorder %s21, 1
    %p236 = por %p234, %p235
    %p238 = scmp.ne.s32.totalorder %s223, %s237
    %p239 = scmp.eq.s32.totalorder %s21, 0
    %p240 = por %p238, %p239
    %s241 = ssub.s32 %s22, %s34
    %s242 = ssub.s32 %s23, %s30
    %s243 = sor.u32 %s241, %s242
    %p244 = scmp.eq.s32.totalorder %s243, 0
    %s246 = sadd.s32 %s245, 1
    %s247 = scalar_select %p244, %s245, %s246
    %p250 = pneg %p244
    %p251 = scmp.eq.s32.totalorder %s15, 1
    %p252 = por %p250, %p251
    %p253 = scmp.ne.s32.totalorder %s245, %s248
    %p254 = scmp.eq.s32.totalorder %s15, 0
    %p255 = por %p253, %p254
    %p256 = scmp.ne.s32.totalorder %s245, %s248
    %p257 = scmp.eq.s32.totalorder %s20, 1
    %p258 = por %p256, %p257
    %p259 = scmp.ne.s32.totalorder %s248, %s249
    %p260 = scmp.eq.s32.totalorder %s20, 0
    %p261 = por %p259, %p260
    %p262 = scmp.ne.s32.totalorder %s248, %s249
    %p263 = scmp.eq.s32.totalorder %s21, 1
    %p264 = por %p262, %p263
    %p266 = scmp.ne.s32.totalorder %s249, %s265
    %p267 = scmp.eq.s32.totalorder %s21, 0
    %p268 = por %p266, %p267
    %p269 = scmp.le.s32.totalorder 1, %s15
    %p270 = scmp.lt.s32.totalorder %s15, 3
    %p271 = pnand %p269, %p270
    %p272 = pneg %p271
    // Predicated region
    $region9: #{tpu_custom_call.1} parent=5 // pred_check
      _
    $region10: #{tpu_custom_call.1} parent=5 // pred_check_branch
      %274 = sbr.rel (%p271) target = $region12
    $region11: #{tpu_custom_call.1} parent=5 // pred_region
      %s275 = ssub.s32 %s15, 1
      // Predicated region
      $region13: #{tpu_custom_call.1} parent=11 // pred_check
        %p276 = pneg %p128
      $region14: #{tpu_custom_call.1} parent=11 // pred_check_branch
        %278 = sbr.rel (%p276) target = $region16
      $region15: #{tpu_custom_call.1} parent=11 // pred_region
        _
      $region16: #{tpu_custom_call.1} parent=11 // pred_fallthru
        _
      // Predicated region
      $region17: #{tpu_custom_call.1} parent=11 // pred_check
        %p279 = pneg %p149
      $region18: #{tpu_custom_call.1} parent=11 // pred_check_branch
        %281 = sbr.rel (%p279) target = $region20
      $region19: #{tpu_custom_call.1} parent=11 // pred_region
        _
      $region20: #{tpu_custom_call.1} parent=11 // pred_fallthru
        _
      // Predicated region
      $region21: #{tpu_custom_call.1} parent=11 // pred_check
        %p282 = pneg %p170
      $region22: #{tpu_custom_call.1} parent=11 // pred_check_branch
        %284 = sbr.rel (%p282) target = $region24
      $region23: #{tpu_custom_call.1} parent=11 // pred_region
        _
      $region24: #{tpu_custom_call.1} parent=11 // pred_fallthru
        _
      // Predicated region
      $region25: #{tpu_custom_call.1} parent=11 // pred_check
        %p285 = pneg %p191
      $region26: #{tpu_custom_call.1} parent=11 // pred_check_branch
        %287 = sbr.rel (%p285) target = $region28
      $region27: #{tpu_custom_call.1} parent=11 // pred_region
        _
      $region28: #{tpu_custom_call.1} parent=11 // pred_fallthru
        _
      // Predicated region
      $region29: #{tpu_custom_call.1} parent=11 // pred_check
        %p288 = pneg %p212
      $region30: #{tpu_custom_call.1} parent=11 // pred_check_branch
        %290 = sbr.rel (%p288) target = $region32
      $region31: #{tpu_custom_call.1} parent=11 // pred_region
        _
      $region32: #{tpu_custom_call.1} parent=11 // pred_fallthru
        _
      // Predicated region
      $region33: #{tpu_custom_call.1} parent=11 // pred_check
        %p291 = pneg %p233
      $region34: #{tpu_custom_call.1} parent=11 // pred_check_branch
        %293 = sbr.rel (%p291) target = $region36
      $region35: #{tpu_custom_call.1} parent=11 // pred_region
        _
      $region36: #{tpu_custom_call.1} parent=11 // pred_fallthru
        _
    $region12: #{tpu_custom_call.1} parent=5 // pred_fallthru
      _
    %p294 = scmp.lt.s32.totalorder %s15, 2
    // Predicated region
    $region37: #{tpu_custom_call.1} parent=5 // pred_check
      %p295 = pneg %p294
    $region38: #{tpu_custom_call.1} parent=5 // pred_check_branch
      %297 = sbr.rel (%p295) target = $region40
    $region39: #{tpu_custom_call.1} parent=5 // pred_region
      // Predicated region
      $region41: #{tpu_custom_call.1} parent=39 // pred_check
        %p298 = pneg %p49
      $region42: #{tpu_custom_call.1} parent=39 // pred_check_branch
        %300 = sbr.rel (%p298) target = $region44
      $region43: #{tpu_custom_call.1} parent=39 // pred_region
        %s301 = smul.u32 32, %s23
        %p302 = scmp.lt.s32.totalorder %s22, 1
        %s303 = scalar_select %p302, %s22, 1
        %p304 = scmp.lt.s32.totalorder %s301, 31
        %s305 = scalar_select %p304, %s301, 31
        %s306 = smul.addr %s303, 32
        %s307 = sadd.s32 %s305, %s306
        %s308 = smul.addr %s307, 4
        %s309 = scalar_lea.vmem %s0, %s308
        %s310 = smul.u32 32, %s23
      $region44: #{tpu_custom_call.1} parent=39 // pred_fallthru
        _
      // Predicated region
      $region45: #{tpu_custom_call.1} parent=39 // pred_check
        %p311 = pneg %p75
      $region46: #{tpu_custom_call.1} parent=39 // pred_check_branch
        %313 = sbr.rel (%p311) target = $region48
      $region47: #{tpu_custom_call.1} parent=39 // pred_region
        %p314 = scmp.lt.s32.totalorder %s22, 1
        %s315 = scalar_select %p314, %s22, 1
        %s316 = smul.addr %s315, 4
        %s317 = scalar_lea.vmem %s1, %s316
      $region48: #{tpu_custom_call.1} parent=39 // pred_fallthru
        _
      // Predicated region
      $region49: #{tpu_custom_call.1} parent=39 // pred_check
        %p318 = pneg %p101
      $region50: #{tpu_custom_call.1} parent=39 // pred_check_branch
        %320 = sbr.rel (%p318) target = $region52
      $region51: #{tpu_custom_call.1} parent=39 // pred_region
        %p321 = scmp.lt.s32.totalorder %s22, 1
        %s322 = scalar_select %p321, %s22, 1
        %s323 = smul.addr %s322, 4
        %s324 = scalar_lea.vmem %s2, %s323
      $region52: #{tpu_custom_call.1} parent=39 // pred_fallthru
        _
    $region40: #{tpu_custom_call.1} parent=5 // pred_fallthru
      _
    %p325 = scmp.le.s32.totalorder 1, %s15
    %p326 = scmp.lt.s32.totalorder %s15, 3
    %p327 = pnand %p325, %p326
    %p328 = pneg %p327
    // Predicated region
    $region53: #{tpu_custom_call.1} parent=5 // pred_check
      _
    $region54: #{tpu_custom_call.1} parent=5 // pred_check_branch
      %330 = sbr.rel (%p327) target = $region56
    $region55: #{tpu_custom_call.1} parent=5 // pred_region
      %s331 = ssub.s32 %s15, 1
      %s332 = smul.u32 32, %s25
      %p333 = scmp.lt.s32.totalorder %s24, 1
      %s334 = scalar_select %p333, %s24, 1
      %p335 = scmp.lt.s32.totalorder %s332, 31
      %s336 = scalar_select %p335, %s332, 31
      %s337 = smul.addr %s334, 32
      %s338 = sadd.s32 %s336, %s337
      %s339 = smul.addr %s338, 4
      %s340 = scalar_lea.vmem %s0, %s339
      %p341 = pneg %p55
      %p342 = pneg %p52
      %p343 = scmp.lt.s32.totalorder %s24, 1
      %s344 = scalar_select %p343, %s24, 1
      %s345 = smul.addr %s344, 4
      %s346 = scalar_lea.vmem %s1, %s345
      %p347 = pneg %p81
      %p348 = pneg %p78
      %p349 = scmp.lt.s32.totalorder %s24, 1
      %s350 = scalar_select %p349, %s24, 1
      %s351 = smul.addr %s350, 4
      %s352 = scalar_lea.vmem %s2, %s351
      %p353 = pneg %p107
      %p354 = pneg %p104
      %p355 = pneg %p128
      %p356 = pneg %p125
      %p357 = pneg %p149
      %p358 = pneg %p146
      %p359 = pneg %p170
      %p360 = pneg %p167
      %p361 = pneg %p191
      %p362 = pneg %p188
      %p363 = pneg %p212
      %p364 = pneg %p209
      %p365 = pneg %p233
      %p366 = pneg %p230
      %p367 = pneg %p261
      %p368 = pneg %p258
      %s369 = smul.u32 32, %s25
      %p370 = scmp.lt.s32.totalorder %s24, 1
      %s371 = scalar_select %p370, %s24, 1
      %p372 = scmp.lt.s32.totalorder %s369, 31
      %s373 = scalar_select %p372, %s369, 31
      %s374 = smul.addr %s371, 32
      %s375 = sadd.s32 %s373, %s374
      %s376 = smul.addr %s375, 4
      %s377 = scalar_lea.vmem %s9, %s376
      %s378 = smul.u32 32, %s25
      %p379 = scmp.lt.s32.totalorder %s24, 1
      %s380 = scalar_select %p379, %s24, 1
      %p381 = scmp.lt.s32.totalorder %s378, 31
      %s382 = scalar_select %p381, %s378, 31
      %s383 = smul.addr %s380, 32
      %s384 = sadd.s32 %s382, %s383
      %s385 = smul.addr %s384, 4
      %s386 = scalar_lea.vmem %s0, %s385
      %s387 = smul.u32 32, %s25
      %p388 = scmp.lt.s32.totalorder %s24, 1
      %s389 = scalar_select %p388, %s24, 1
      %s390 = smul.addr %s389, 4
      %s391 = scalar_lea.vmem %s1, %s390
      %p392 = scmp.lt.s32.totalorder %s24, 1
      %s393 = scalar_select %p392, %s24, 1
      %s394 = smul.addr %s393, 4
      %s395 = scalar_lea.vmem %s2, %s394
      %s396 = smul.u32 32, %s25
      %p397 = scmp.lt.s32.totalorder %s24, 1
      %s398 = scalar_select %p397, %s24, 1
      %p399 = scmp.lt.s32.totalorder %s396, 31
      %s400 = scalar_select %p399, %s396, 31
      %s401 = smul.addr %s398, 32
      %s402 = sadd.s32 %s400, %s401
      %s403 = smul.addr %s402, 4
      %s404 = scalar_lea.vmem %s9, %s403
      %s405 = smul.u32 32, %s25
      %v407 = vld [vmem:[%s386] sm:$0xf]
      %v408 = vld [vmem:[%s386 + $0x4] sm:$0xf]
      %v409 = vld [vmem:[%s386 + $0x8] sm:$0xf]
      %v410 = vld [vmem:[%s386 + $0xc] sm:$0xf]
      %v411 = vld [vmem:[%s386 + $0x10] sm:$0xf]
      %v412 = vld [vmem:[%s386 + $0x14] sm:$0xf]
      %v413 = vld [vmem:[%s386 + $0x18] sm:$0xf]
      %v414 = vld [vmem:[%s386 + $0x1c] sm:$0xf]
      %v415 = vld [vmem:[%s386 + $0x20] sm:$0xf]
      %v416 = vld [vmem:[%s386 + $0x24] sm:$0xf]
      %v417 = vld [vmem:[%s386 + $0x28] sm:$0xf]
      %v418 = vld [vmem:[%s386 + $0x2c] sm:$0xf]
      %v419 = vld [vmem:[%s386 + $0x30] sm:$0xf]
      %v420 = vld [vmem:[%s386 + $0x34] sm:$0xf]
      %v421 = vld [vmem:[%s386 + $0x38] sm:$0xf]
      %v422 = vld [vmem:[%s386 + $0x3c] sm:$0xf]
      %v423 = vld [vmem:[%s386 + $0x40] sm:$0xf]
      %v424 = vld [vmem:[%s386 + $0x44] sm:$0xf]
      %v425 = vld [vmem:[%s386 + $0x48] sm:$0xf]
      %v426 = vld [vmem:[%s386 + $0x4c] sm:$0xf]
      %v427 = vld [vmem:[%s386 + $0x50] sm:$0xf]
      %v428 = vld [vmem:[%s386 + $0x54] sm:$0xf]
      %v429 = vld [vmem:[%s386 + $0x58] sm:$0xf]
      %v430 = vld [vmem:[%s386 + $0x5c] sm:$0xf]
      %v431 = vld [vmem:[%s386 + $0x60] sm:$0xf]
      %v432 = vld [vmem:[%s386 + $0x64] sm:$0xf]
      %v433 = vld [vmem:[%s386 + $0x68] sm:$0xf]
      %v434 = vld [vmem:[%s386 + $0x6c] sm:$0xf]
      %v435 = vld [vmem:[%s386 + $0x70] sm:$0xf]
      %v436 = vld [vmem:[%s386 + $0x74] sm:$0xf]
      %v437 = vld [vmem:[%s386 + $0x78] sm:$0xf]
      %v438 = vld [vmem:[%s386 + $0x7c] sm:$0xf]
      %v439 = vld [vmem:[%s391] sm:$0xf]
      %v440 = vld [vmem:[%s395] sm:$0xf]
      %v441 = vld [vmem:[%s3] sm:$0xf]
      %v442 = vld [vmem:[%s3 + $0x4] sm:$0xf]
      %v443 = vld [vmem:[%s4] sm:$0x1]
      %v445 = vlaneseq
      %v446 = vshrl.u32 %v445, 7
      %v447 = vsub.s32 0, %v446
      %v448 = vrot.slane %v443, %v447
      %v482 = vunpack.c.l.b16 %v407
      %v483 = vunpack.c.l.b16 %v408
      %v484 = vunpack.c.l.b16 %v409
      %v485 = vunpack.c.l.b16 %v410
      %v486 = vunpack.c.l.b16 %v411
      %v487 = vunpack.c.l.b16 %v412
      %v488 = vunpack.c.l.b16 %v413
      %v489 = vunpack.c.l.b16 %v414
      %v490 = vunpack.c.l.b16 %v415
      %v491 = vunpack.c.l.b16 %v416
      %v492 = vunpack.c.l.b16 %v417
      %v493 = vunpack.c.l.b16 %v418
      %v494 = vunpack.c.l.b16 %v419
      %v495 = vunpack.c.l.b16 %v420
      %v496 = vunpack.c.l.b16 %v421
      %v497 = vunpack.c.l.b16 %v422
      %v498 = vunpack.c.l.b16 %v423
      %v499 = vunpack.c.l.b16 %v424
      %v500 = vunpack.c.l.b16 %v425
      %v501 = vunpack.c.l.b16 %v426
      %v502 = vunpack.c.l.b16 %v427
      %v503 = vunpack.c.l.b16 %v428
      %v504 = vunpack.c.l.b16 %v429
      %v505 = vunpack.c.l.b16 %v430
      %v506 = vunpack.c.l.b16 %v431
      %v507 = vunpack.c.l.b16 %v432
      %v508 = vunpack.c.l.b16 %v433
      %v509 = vunpack.c.l.b16 %v434
      %v510 = vunpack.c.l.b16 %v435
      %v511 = vunpack.c.l.b16 %v436
      %v512 = vunpack.c.l.b16 %v437
      %v513 = vunpack.c.l.b16 %v438
      %v514 = vpack.c.b16 %v483, %v482
      %v515 = vpack.c.b16 %v485, %v484
      %v516 = vpack.c.b16 %v487, %v486
      %v517 = vpack.c.b16 %v489, %v488
      %v518 = vpack.c.b16 %v491, %v490
      %v519 = vpack.c.b16 %v493, %v492
      %v520 = vpack.c.b16 %v495, %v494
      %v521 = vpack.c.b16 %v497, %v496
      %v522 = vpack.c.b16 %v499, %v498
      %v523 = vpack.c.b16 %v501, %v500
      %v524 = vpack.c.b16 %v503, %v502
      %v525 = vpack.c.b16 %v505, %v504
      %v526 = vpack.c.b16 %v507, %v506
      %v527 = vpack.c.b16 %v509, %v508
      %v528 = vpack.c.b16 %v511, %v510
      %v529 = vpack.c.b16 %v513, %v512
      %v532 = vunpack.c.l.b16 %v441
      %v533 = vunpack.c.l.b16 %v442
      %v534 = vpack.c.b16 %v533, %v532
      %vm536 = vcmask 130048
      %v538 = vsel %vm536, %v514, 0
      %v541 = vsel %vm536, %v515, 0
      %v544 = vsel %vm536, %v516, 0
      %v547 = vsel %vm536, %v517, 0
      %v550 = vsel %vm536, %v518, 0
      %v553 = vsel %vm536, %v519, 0
      %v556 = vsel %vm536, %v520, 0
      %v559 = vsel %vm536, %v521, 0
      %v562 = vsel %vm536, %v522, 0
      %v565 = vsel %vm536, %v523, 0
      %v568 = vsel %vm536, %v524, 0
      %v571 = vsel %vm536, %v525, 0
      %v574 = vsel %vm536, %v526, 0
      %v577 = vsel %vm536, %v527, 0
      %v580 = vsel %vm536, %v528, 0
      %v583 = vsel %vm536, %v529, 0
      %585 = vmatprep.subr.bf16.mxu0 0
      %586 = vmatpush1.bf16.msra.mxu0 %v534
      %587 = vmatprep.subr.bf16.mxu0 0
      %588 = vmatpush1.bf16.msra.mxu0 0
      %589 = vmatprep.subr.bf16.mxu0 0
      %590 = vmatpush1.bf16.msra.mxu0 0
      %591 = vmatprep.subr.bf16.mxu0 0
      %592 = vmatpush1.bf16.msra.mxu0 0
      %593 = vmatprep.subr.bf16.mxu0 0
      %594 = vmatpush1.bf16.msra.mxu0 0
      %595 = vmatprep.subr.bf16.mxu0 0
      %596 = vmatpush1.bf16.msra.mxu0 0
      %597 = vmatprep.subr.bf16.mxu0 0
      %598 = vmatpush1.bf16.msra.mxu0 0
      %599 = vmatprep.subr.bf16.mxu0 0
      %600 = vmatpush1.bf16.msra.mxu0 0
      %601 = vmatprep.subr.bf16.mxu0 0
      %602 = vmatpush1.bf16.msra.mxu0 0
      %603 = vmatprep.subr.bf16.mxu0 0
      %604 = vmatpush1.bf16.msra.mxu0 0
      %605 = vmatprep.subr.bf16.mxu0 0
      %606 = vmatpush1.bf16.msra.mxu0 0
      %607 = vmatprep.subr.bf16.mxu0 0
      %608 = vmatpush1.bf16.msra.mxu0 0
      %609 = vmatprep.subr.bf16.mxu0 0
      %610 = vmatpush1.bf16.msra.mxu0 0
      %611 = vmatprep.subr.bf16.mxu0 0
      %612 = vmatpush1.bf16.msra.mxu0 0
      %613 = vmatprep.subr.bf16.mxu0 0
      %614 = vmatpush1.bf16.msra.mxu0 0
      %615 = vmatprep.subr.bf16.mxu0 0
      %616 = vmatpush1.bf16.msra.mxu0 0
      %617 = vmatprep.mubr.bf16.mxu0 0
      %618 = vmatmul.mubr.bf16.gmra.mrb[0].mxu0 %v538
      %v619 = vpop.f32.mrb[0].mxu0
      %v620 = vadd.f32 %v448, %v619
      %v621 = vpop.f32.mrb[0].mxu0
      %v622 = vpop.f32.mrb[0].mxu0
      %v623 = vadd.f32 %v448, %v622
      %v624 = vpop.f32.mrb[0].mxu0
      %625 = vmatprep.mubr.bf16.mxu0 0
      %626 = vmatmul.mubr.bf16.gmra.mrb[0].mxu0 %v541
      %v627 = vpop.f32.mrb[0].mxu0
      %v628 = vadd.f32 %v448, %v627
      %v629 = vpop.f32.mrb[0].mxu0
      %v630 = vpop.f32.mrb[0].mxu0
      %v631 = vadd.f32 %v448, %v630
      %v632 = vpop.f32.mrb[0].mxu0
      %633 = vmatprep.mubr.bf16.mxu0 0
      %634 = vmatmul.mubr.bf16.gmra.mrb[0].mxu0 %v544
      %v635 = vpop.f32.mrb[0].mxu0
      %v636 = vadd.f32 %v448, %v635
      %v637 = vpop.f32.mrb[0].mxu0
      %v638 = vpop.f32.mrb[0].mxu0
      %v639 = vadd.f32 %v448, %v638
      %v640 = vpop.f32.mrb[0].mxu0
      %641 = vmatprep.mubr.bf16.mxu0 0
      %642 = vmatmul.mubr.bf16.gmra.mrb[0].mxu0 %v547
      %v643 = vpop.f32.mrb[0].mxu0
      %v644 = vadd.f32 %v448, %v643
      %v645 = vpop.f32.mrb[0].mxu0
      %v646 = vpop.f32.mrb[0].mxu0
      %v647 = vadd.f32 %v448, %v646
      %v648 = vpop.f32.mrb[0].mxu0
      %649 = vmatprep.mubr.bf16.mxu0 0
      %650 = vmatmul.mubr.bf16.gmra.mrb[0].mxu0 %v550
      %v651 = vpop.f32.mrb[0].mxu0
      %v652 = vadd.f32 %v448, %v651
      %v653 = vpop.f32.mrb[0].mxu0
      %v654 = vpop.f32.mrb[0].mxu0
      %v655 = vadd.f32 %v448, %v654
      %v656 = vpop.f32.mrb[0].mxu0
      %657 = vmatprep.mubr.bf16.mxu0 0
      %658 = vmatmul.mubr.bf16.gmra.mrb[0].mxu0 %v553
      %v659 = vpop.f32.mrb[0].mxu0
      %v660 = vadd.f32 %v448, %v659
      %v661 = vpop.f32.mrb[0].mxu0
      %v662 = vpop.f32.mrb[0].mxu0
      %v663 = vadd.f32 %v448, %v662
      %v664 = vpop.f32.mrb[0].mxu0
      %665 = vmatprep.mubr.bf16.mxu0 0
      %666 = vmatmul.mubr.bf16.gmra.mrb[0].mxu0 %v556
      %v667 = vpop.f32.mrb[0].mxu0
      %v668 = vadd.f32 %v448, %v667
      %v669 = vpop.f32.mrb[0].mxu0
      %v670 = vpop.f32.mrb[0].mxu0
      %v671 = vadd.f32 %v448, %v670
      %v672 = vpop.f32.mrb[0].mxu0
      %673 = vmatprep.mubr.bf16.mxu0 0
      %674 = vmatmul.mubr.bf16.gmra.mrb[0].mxu0 %v559
      %v675 = vpop.f32.mrb[0].mxu0
      %v676 = vadd.f32 %v448, %v675
      %v677 = vpop.f32.mrb[0].mxu0
      %v678 = vpop.f32.mrb[0].mxu0
      %v679 = vadd.f32 %v448, %v678
      %v680 = vpop.f32.mrb[0].mxu0
      %681 = vmatprep.mubr.bf16.mxu0 0
      %682 = vmatmul.mubr.bf16.gmra.mrb[0].mxu0 %v562
      %v683 = vpop.f32.mrb[0].mxu0
      %v684 = vadd.f32 %v448, %v683
      %v685 = vpop.f32.mrb[0].mxu0
      %v686 = vpop.f32.mrb[0].mxu0
      %v687 = vadd.f32 %v448, %v686
      %v688 = vpop.f32.mrb[0].mxu0
      %689 = vmatprep.mubr.bf16.mxu0 0
      %690 = vmatmul.mubr.bf16.gmra.mrb[0].mxu0 %v565
      %v691 = vpop.f32.mrb[0].mxu0
      %v692 = vadd.f32 %v448, %v691
      %v693 = vpop.f32.mrb[0].mxu0
      %v694 = vpop.f32.mrb[0].mxu0
      %v695 = vadd.f32 %v448, %v694
      %v696 = vpop.f32.mrb[0].mxu0
      %697 = vmatprep.mubr.bf16.mxu0 0
      %698 = vmatmul.mubr.bf16.gmra.mrb[0].mxu0 %v568
      %v699 = vpop.f32.mrb[0].mxu0
      %v700 = vadd.f32 %v448, %v699
      %v701 = vpop.f32.mrb[0].mxu0
      %v702 = vpop.f32.mrb[0].mxu0
      %v703 = vadd.f32 %v448, %v702
      %v704 = vpop.f32.mrb[0].mxu0
      %705 = vmatprep.mubr.bf16.mxu0 0
      %706 = vmatmul.mubr.bf16.gmra.mrb[0].mxu0 %v571
      %v707 = vpop.f32.mrb[0].mxu0
      %v708 = vadd.f32 %v448, %v707
      %v709 = vpop.f32.mrb[0].mxu0
      %v710 = vpop.f32.mrb[0].mxu0
      %v711 = vadd.f32 %v448, %v710
      %v712 = vpop.f32.mrb[0].mxu0
      %713 = vmatprep.mubr.bf16.mxu0 0
      %714 = vmatmul.mubr.bf16.gmra.mrb[0].mxu0 %v574
      %v715 = vpop.f32.mrb[0].mxu0
      %v716 = vadd.f32 %v448, %v715
      %v717 = vpop.f32.mrb[0].mxu0
      %v718 = vpop.f32.mrb[0].mxu0
      %v719 = vadd.f32 %v448, %v718
      %v720 = vpop.f32.mrb[0].mxu0
      %721 = vmatprep.mubr.bf16.mxu0 0
      %722 = vmatmul.mubr.bf16.gmra.mrb[0].mxu0 %v577
      %v723 = vpop.f32.mrb[0].mxu0
      %v724 = vadd.f32 %v448, %v723
      %v725 = vpop.f32.mrb[0].mxu0
      %v726 = vpop.f32.mrb[0].mxu0
      %v727 = vadd.f32 %v448, %v726
      %v728 = vpop.f32.mrb[0].mxu0
      %729 = vmatprep.mubr.bf16.mxu0 0
      %730 = vmatmul.mubr.bf16.gmra.mrb[0].mxu0 %v580
      %v731 = vpop.f32.mrb[0].mxu0
      %v732 = vadd.f32 %v448, %v731
      %v733 = vpop.f32.mrb[0].mxu0
      %v734 = vpop.f32.mrb[0].mxu0
      %v735 = vadd.f32 %v448, %v734
      %v736 = vpop.f32.mrb[0].mxu0
      %737 = vmatprep.mubr.bf16.mxu0 0
      %738 = vmatmul.mubr.bf16.gmra.mrb[0].mxu0 %v583
      %v739 = vpop.f32.mrb[0].mxu0
      %v740 = vadd.f32 %v448, %v739
      %v741 = vpop.f32.mrb[0].mxu0
      %v742 = vpop.f32.mrb[0].mxu0
      %v743 = vadd.f32 %v448, %v742
      %v744 = vpop.f32.mrb[0].mxu0
      %745 = vdwg.mxu0
      %v746 = vmax.f32 %v620, 0.0
      %v747 = vmax.f32 %v623, 0.0
      %v748 = vmax.f32 %v628, 0.0
      %v749 = vmax.f32 %v631, 0.0
      %v750 = vmax.f32 %v636, 0.0
      %v751 = vmax.f32 %v639, 0.0
      %v752 = vmax.f32 %v644, 0.0
      %v753 = vmax.f32 %v647, 0.0
      %v754 = vmax.f32 %v652, 0.0
      %v755 = vmax.f32 %v655, 0.0
      %v756 = vmax.f32 %v660, 0.0
      %v757 = vmax.f32 %v663, 0.0
      %v758 = vmax.f32 %v668, 0.0
      %v759 = vmax.f32 %v671, 0.0
      %v760 = vmax.f32 %v676, 0.0
      %v761 = vmax.f32 %v679, 0.0
      %v762 = vmax.f32 %v684, 0.0
      %v763 = vmax.f32 %v687, 0.0
      %v764 = vmax.f32 %v692, 0.0
      %v765 = vmax.f32 %v695, 0.0
      %v766 = vmax.f32 %v700, 0.0
      %v767 = vmax.f32 %v703, 0.0
      %v768 = vmax.f32 %v708, 0.0
      %v769 = vmax.f32 %v711, 0.0
      %v770 = vmax.f32 %v716, 0.0
      %v771 = vmax.f32 %v719, 0.0
      %v772 = vmax.f32 %v724, 0.0
      %v773 = vmax.f32 %v727, 0.0
      %v774 = vmax.f32 %v732, 0.0
      %v775 = vmax.f32 %v735, 0.0
      %v776 = vmax.f32 %v740, 0.0
      %v777 = vmax.f32 %v743, 0.0
      %v778 = vpack.c.bf16 %v747, %v746
      %v779 = vpack.c.bf16 %v749, %v748
      %v780 = vpack.c.bf16 %v751, %v750
      %v781 = vpack.c.bf16 %v753, %v752
      %v782 = vpack.c.bf16 %v755, %v754
      %v783 = vpack.c.bf16 %v757, %v756
      %v784 = vpack.c.bf16 %v759, %v758
      %v785 = vpack.c.bf16 %v761, %v760
      %v786 = vpack.c.bf16 %v763, %v762
      %v787 = vpack.c.bf16 %v765, %v764
      %v788 = vpack.c.bf16 %v767, %v766
      %v789 = vpack.c.bf16 %v769, %v768
      %v790 = vpack.c.bf16 %v771, %v770
      %v791 = vpack.c.bf16 %v773, %v772
      %v792 = vpack.c.bf16 %v775, %v774
      %v793 = vpack.c.bf16 %v777, %v776
      %v794 = vld [vmem:[%s5] sm:$0xf]
      %v795 = vld [vmem:[%s5 + $0x4] sm:$0xf]
      %v796 = vld [vmem:[%s5 + $0x8] sm:$0xf]
      %v797 = vld [vmem:[%s5 + $0xc] sm:$0xf]
      %v798 = vld [vmem:[%s6] sm:$0x1]
      %v800 = vlaneseq
      %v801 = vshrl.u32 %v800, 7
      %v802 = vsub.s32 0, %v801
      %v803 = vrot.slane %v798, %v802
      %v809 = vunpack.c.l.b16 %v794
      %v810 = vunpack.c.l.b16 %v795
      %v811 = vunpack.c.l.b16 %v796
      %v812 = vunpack.c.l.b16 %v797
      %v813 = vpack.c.b16 %v810, %v809
      %v814 = vpack.c.b16 %v812, %v811
      %vm817 = vcmask 261120
      %v819 = vsel %vm817, %v778, 0
      %v822 = vsel %vm817, %v779, 0
      %v825 = vsel %vm817, %v780, 0
      %v828 = vsel %vm817, %v781, 0
      %v831 = vsel %vm817, %v782, 0
      %v834 = vsel %vm817, %v783, 0
      %v837 = vsel %vm817, %v784, 0
      %v840 = vsel %vm817, %v785, 0
      %v843 = vsel %vm817, %v786, 0
      %v846 = vsel %vm817, %v787, 0
      %v849 = vsel %vm817, %v788, 0
      %v852 = vsel %vm817, %v789, 0
      %v855 = vsel %vm817, %v790, 0
      %v858 = vsel %vm817, %v791, 0
      %v861 = vsel %vm817, %v792, 0
      %v864 = vsel %vm817, %v793, 0
      %866 = vmatprep.subr.bf16.mxu0 0
      %867 = vmatpush1.bf16.msra.mxu0 %v813
      %868 = vmatprep.subr.bf16.mxu0 0
      %869 = vmatpush1.bf16.msra.mxu0 %v814
      %870 = vmatprep.subr.bf16.mxu0 0
      %871 = vmatpush1.bf16.msra.mxu0 0
      %872 = vmatprep.subr.bf16.mxu0 0
      %873 = vmatpush1.bf16.msra.mxu0 0
      %874 = vmatprep.subr.bf16.mxu0 0
      %875 = vmatpush1.bf16.msra.mxu0 0
      %876 = vmatprep.subr.bf16.mxu0 0
      %877 = vmatpush1.bf16.msra.mxu0 0
      %878 = vmatprep.subr.bf16.mxu0 0
      %879 = vmatpush1.bf16.msra.mxu0 0
      %880 = vmatprep.subr.bf16.mxu0 0
      %881 = vmatpush1.bf16.msra.mxu0 0
      %882 = vmatprep.subr.bf16.mxu0 0
      %883 = vmatpush1.bf16.msra.mxu0 0
      %884 = vmatprep.subr.bf16.mxu0 0
      %885 = vmatpush1.bf16.msra.mxu0 0
      %886 = vmatprep.subr.bf16.mxu0 0
      %887 = vmatpush1.bf16.msra.mxu0 0
      %888 = vmatprep.subr.bf16.mxu0 0
      %889 = vmatpush1.bf16.msra.mxu0 0
      %890 = vmatprep.subr.bf16.mxu0 0
      %891 = vmatpush1.bf16.msra.mxu0 0
      %892 = vmatprep.subr.bf16.mxu0 0
      %893 = vmatpush1.bf16.msra.mxu0 0
      %894 = vmatprep.subr.bf16.mxu0 0
      %895 = vmatpush1.bf16.msra.mxu0 0
      %896 = vmatprep.subr.bf16.mxu0 0
      %897 = vmatpush1.bf16.msra.mxu0 0
      %898 = vmatprep.mubr.bf16.mxu0 0
      %899 = vmatmul.mubr.bf16.gmra.mrb[0].mxu0 %v819
      %v900 = vpop.f32.mrb[0].mxu0
      %v901 = vadd.f32 %v803, %v900
      %v902 = vpop.f32.mrb[0].mxu0
      %v903 = vpop.f32.mrb[0].mxu0
      %v904 = vadd.f32 %v803, %v903
      %v905 = vpop.f32.mrb[0].mxu0
      %906 = vmatprep.mubr.bf16.mxu0 0
      %907 = vmatmul.mubr.bf16.gmra.mrb[0].mxu0 %v822
      %v908 = vpop.f32.mrb[0].mxu0
      %v909 = vadd.f32 %v803, %v908
      %v910 = vpop.f32.mrb[0].mxu0
      %v911 = vpop.f32.mrb[0].mxu0
      %v912 = vadd.f32 %v803, %v911
      %v913 = vpop.f32.mrb[0].mxu0
      %914 = vmatprep.mubr.bf16.mxu0 0
      %915 = vmatmul.mubr.bf16.gmra.mrb[0].mxu0 %v825
      %v916 = vpop.f32.mrb[0].mxu0
      %v917 = vadd.f32 %v803, %v916
      %v918 = vpop.f32.mrb[0].mxu0
      %v919 = vpop.f32.mrb[0].mxu0
      %v920 = vadd.f32 %v803, %v919
      %v921 = vpop.f32.mrb[0].mxu0
      %922 = vmatprep.mubr.bf16.mxu0 0
      %923 = vmatmul.mubr.bf16.gmra.mrb[0].mxu0 %v828
      %v924 = vpop.f32.mrb[0].mxu0
      %v925 = vadd.f32 %v803, %v924
      %v926 = vpop.f32.mrb[0].mxu0
      %v927 = vpop.f32.mrb[0].mxu0
      %v928 = vadd.f32 %v803, %v927
      %v929 = vpop.f32.mrb[0].mxu0
      %930 = vmatprep.mubr.bf16.mxu0 0
      %931 = vmatmul.mubr.bf16.gmra.mrb[0].mxu0 %v831
      %v932 = vpop.f32.mrb[0].mxu0
      %v933 = vadd.f32 %v803, %v932
      %v934 = vpop.f32.mrb[0].mxu0
      %v935 = vpop.f32.mrb[0].mxu0
      %v936 = vadd.f32 %v803, %v935
      %v937 = vpop.f32.mrb[0].mxu0
      %938 = vmatprep.mubr.bf16.mxu0 0
      %939 = vmatmul.mubr.bf16.gmra.mrb[0].mxu0 %v834
      %v940 = vpop.f32.mrb[0].mxu0
      %v941 = vadd.f32 %v803, %v940
      %v942 = vpop.f32.mrb[0].mxu0
      %v943 = vpop.f32.mrb[0].mxu0
      %v944 = vadd.f32 %v803, %v943
      %v945 = vpop.f32.mrb[0].mxu0
      %946 = vmatprep.mubr.bf16.mxu0 0
      %947 = vmatmul.mubr.bf16.gmra.mrb[0].mxu0 %v837
      %v948 = vpop.f32.mrb[0].mxu0
      %v949 = vadd.f32 %v803, %v948
      %v950 = vpop.f32.mrb[0].mxu0
      %v951 = vpop.f32.mrb[0].mxu0
      %v952 = vadd.f32 %v803, %v951
      %v953 = vpop.f32.mrb[0].mxu0
      %954 = vmatprep.mubr.bf16.mxu0 0
      %955 = vmatmul.mubr.bf16.gmra.mrb[0].mxu0 %v840
      %v956 = vpop.f32.mrb[0].mxu0
      %v957 = vadd.f32 %v803, %v956
      %v958 = vpop.f32.mrb[0].mxu0
      %v959 = vpop.f32.mrb[0].mxu0
      %v960 = vadd.f32 %v803, %v959
      %v961 = vpop.f32.mrb[0].mxu0
      %962 = vmatprep.mubr.bf16.mxu0 0
      %963 = vmatmul.mubr.bf16.gmra.mrb[0].mxu0 %v843
      %v964 = vpop.f32.mrb[0].mxu0
      %v965 = vadd.f32 %v803, %v964
      %v966 = vpop.f32.mrb[0].mxu0
      %v967 = vpop.f32.mrb[0].mxu0
      %v968 = vadd.f32 %v803, %v967
      %v969 = vpop.f32.mrb[0].mxu0
      %970 = vmatprep.mubr.bf16.mxu0 0
      %971 = vmatmul.mubr.bf16.gmra.mrb[0].mxu0 %v846
      %v972 = vpop.f32.mrb[0].mxu0
      %v973 = vadd.f32 %v803, %v972
      %v974 = vpop.f32.mrb[0].mxu0
      %v975 = vpop.f32.mrb[0].mxu0
      %v976 = vadd.f32 %v803, %v975
      %v977 = vpop.f32.mrb[0].mxu0
      %978 = vmatprep.mubr.bf16.mxu0 0
      %979 = vmatmul.mubr.bf16.gmra.mrb[0].mxu0 %v849
      %v980 = vpop.f32.mrb[0].mxu0
      %v981 = vadd.f32 %v803, %v980
      %v982 = vpop.f32.mrb[0].mxu0
      %v983 = vpop.f32.mrb[0].mxu0
      %v984 = vadd.f32 %v803, %v983
      %v985 = vpop.f32.mrb[0].mxu0
      %986 = vmatprep.mubr.bf16.mxu0 0
      %987 = vmatmul.mubr.bf16.gmra.mrb[0].mxu0 %v852
      %v988 = vpop.f32.mrb[0].mxu0
      %v989 = vadd.f32 %v803, %v988
      %v990 = vpop.f32.mrb[0].mxu0
      %v991 = vpop.f32.mrb[0].mxu0
      %v992 = vadd.f32 %v803, %v991
      %v993 = vpop.f32.mrb[0].mxu0
      %994 = vmatprep.mubr.bf16.mxu0 0
      %995 = vmatmul.mubr.bf16.gmra.mrb[0].mxu0 %v855
      %v996 = vpop.f32.mrb[0].mxu0
      %v997 = vadd.f32 %v803, %v996
      %v998 = vpop.f32.mrb[0].mxu0
      %v999 = vpop.f32.mrb[0].mxu0
      %v1000 = vadd.f32 %v803, %v999
      %v1001 = vpop.f32.mrb[0].mxu0
      %1002 = vmatprep.mubr.bf16.mxu0 0
      %1003 = vmatmul.mubr.bf16.gmra.mrb[0].mxu0 %v858
      %v1004 = vpop.f32.mrb[0].mxu0
      %v1005 = vadd.f32 %v803, %v1004
      %v1006 = vpop.f32.mrb[0].mxu0
      %v1007 = vpop.f32.mrb[0].mxu0
      %v1008 = vadd.f32 %v803, %v1007
      %v1009 = vpop.f32.mrb[0].mxu0
      %1010 = vmatprep.mubr.bf16.mxu0 0
      %1011 = vmatmul.mubr.bf16.gmra.mrb[0].mxu0 %v861
      %v1012 = vpop.f32.mrb[0].mxu0
      %v1013 = vadd.f32 %v803, %v1012
      %v1014 = vpop.f32.mrb[0].mxu0
      %v1015 = vpop.f32.mrb[0].mxu0
      %v1016 = vadd.f32 %v803, %v1015
      %v1017 = vpop.f32.mrb[0].mxu0
      %1018 = vmatprep.mubr.bf16.mxu0 0
      %1019 = vmatmul.mubr.bf16.gmra.mrb[0].mxu0 %v864
      %v1020 = vpop.f32.mrb[0].mxu0
      %v1021 = vadd.f32 %v803, %v1020
      %v1022 = vpop.f32.mrb[0].mxu0
      %v1023 = vpop.f32.mrb[0].mxu0
      %v1024 = vadd.f32 %v803, %v1023
      %v1025 = vpop.f32.mrb[0].mxu0
      %1026 = vdwg.mxu0
      %v1027 = vmax.f32 %v901, 0.0
      %v1028 = vmax.f32 %v904, 0.0
      %v1029 = vmax.f32 %v909, 0.0
      %v1030 = vmax.f32 %v912, 0.0
      %v1031 = vmax.f32 %v917, 0.0
      %v1032 = vmax.f32 %v920, 0.0
      %v1033 = vmax.f32 %v925, 0.0
      %v1034 = vmax.f32 %v928, 0.0
      %v1035 = vmax.f32 %v933, 0.0
      %v1036 = vmax.f32 %v936, 0.0
      %v1037 = vmax.f32 %v941, 0.0
      %v1038 = vmax.f32 %v944, 0.0
      %v1039 = vmax.f32 %v949, 0.0
      %v1040 = vmax.f32 %v952, 0.0
      %v1041 = vmax.f32 %v957, 0.0
      %v1042 = vmax.f32 %v960, 0.0
      %v1043 = vmax.f32 %v965, 0.0
      %v1044 = vmax.f32 %v968, 0.0
      %v1045 = vmax.f32 %v973, 0.0
      %v1046 = vmax.f32 %v976, 0.0
      %v1047 = vmax.f32 %v981, 0.0
      %v1048 = vmax.f32 %v984, 0.0
      %v1049 = vmax.f32 %v989, 0.0
      %v1050 = vmax.f32 %v992, 0.0
      %v1051 = vmax.f32 %v997, 0.0
      %v1052 = vmax.f32 %v1000, 0.0
      %v1053 = vmax.f32 %v1005, 0.0
      %v1054 = vmax.f32 %v1008, 0.0
      %v1055 = vmax.f32 %v1013, 0.0
      %v1056 = vmax.f32 %v1016, 0.0
      %v1057 = vmax.f32 %v1021, 0.0
      %v1058 = vmax.f32 %v1024, 0.0
      %v1059 = vpack.c.bf16 %v1028, %v1027
      %v1060 = vpack.c.bf16 %v1030, %v1029
      %v1061 = vpack.c.bf16 %v1032, %v1031
      %v1062 = vpack.c.bf16 %v1034, %v1033
      %v1063 = vpack.c.bf16 %v1036, %v1035
      %v1064 = vpack.c.bf16 %v1038, %v1037
      %v1065 = vpack.c.bf16 %v1040, %v1039
      %v1066 = vpack.c.bf16 %v1042, %v1041
      %v1067 = vpack.c.bf16 %v1044, %v1043
      %v1068 = vpack.c.bf16 %v1046, %v1045
      %v1069 = vpack.c.bf16 %v1048, %v1047
      %v1070 = vpack.c.bf16 %v1050, %v1049
      %v1071 = vpack.c.bf16 %v1052, %v1051
      %v1072 = vpack.c.bf16 %v1054, %v1053
      %v1073 = vpack.c.bf16 %v1056, %v1055
      %v1074 = vpack.c.bf16 %v1058, %v1057
      %v1076 = vsel %vm817, %v1059, 0
      %v1079 = vsel %vm817, %v1060, 0
      %v1082 = vsel %vm817, %v1061, 0
      %v1085 = vsel %vm817, %v1062, 0
      %v1088 = vsel %vm817, %v1063, 0
      %v1091 = vsel %vm817, %v1064, 0
      %v1094 = vsel %vm817, %v1065, 0
      %v1097 = vsel %vm817, %v1066, 0
      %v1100 = vsel %vm817, %v1067, 0
      %v1103 = vsel %vm817, %v1068, 0
      %v1106 = vsel %vm817, %v1069, 0
      %v1109 = vsel %vm817, %v1070, 0
      %v1112 = vsel %vm817, %v1071, 0
      %v1115 = vsel %vm817, %v1072, 0
      %v1118 = vsel %vm817, %v1073, 0
      %v1121 = vsel %vm817, %v1074, 0
      %v1124 = vsel %vm817, %v439, 0
      %1126 = vmatprep.subr.bf16.mxu0 0
      %1127 = vmatpush1.bf16.xpose.msra.mxu0 %v1124
      %1128 = vmatprep.subr.bf16.mxu0 0
      %1129 = vmatpush1.bf16.xpose.msra.mxu0 0
      %1130 = vmatprep.subr.bf16.mxu0 0
      %1131 = vmatpush1.bf16.xpose.msra.mxu0 0
      %1132 = vmatprep.subr.bf16.mxu0 0
      %1133 = vmatpush1.bf16.xpose.msra.mxu0 0
      %1134 = vmatprep.subr.bf16.mxu0 0
      %1135 = vmatpush1.bf16.xpose.msra.mxu0 0
      %1136 = vmatprep.subr.bf16.mxu0 0
      %1137 = vmatpush1.bf16.xpose.msra.mxu0 0
      %1138 = vmatprep.subr.bf16.mxu0 0
      %1139 = vmatpush1.bf16.xpose.msra.mxu0 0
      %1140 = vmatprep.subr.bf16.mxu0 0
      %1141 = vmatpush1.bf16.xpose.msra.mxu0 0
      %1142 = vmatprep.subr.bf16.mxu0 0
      %1143 = vmatpush1.bf16.xpose.msra.mxu0 0
      %1144 = vmatprep.subr.bf16.mxu0 0
      %1145 = vmatpush1.bf16.xpose.msra.mxu0 0
      %1146 = vmatprep.subr.bf16.mxu0 0
      %1147 = vmatpush1.bf16.xpose.msra.mxu0 0
      %1148 = vmatprep.subr.bf16.mxu0 0
      %1149 = vmatpush1.bf16.xpose.msra.mxu0 0
      %1150 = vmatprep.subr.bf16.mxu0 0
      %1151 = vmatpush1.bf16.xpose.msra.mxu0 0
      %1152 = vmatprep.subr.bf16.mxu0 0
      %1153 = vmatpush1.bf16.xpose.msra.mxu0 0
      %1154 = vmatprep.subr.bf16.mxu0 0
      %1155 = vmatpush1.bf16.xpose.msra.mxu0 0
      %1156 = vmatprep.subr.bf16.mxu0 0
      %1157 = vmatpush1.bf16.xpose.msra.mxu0 0
      %1158 = vmatprep.mubr.bf16.mxu0 0
      %1159 = vmatmul.mubr.bf16.gmra.mrb[0].mxu0 %v1076
      %v1160 = vpop.f32.mrb[0].mxu0
      %v1161 = vadd.f32 0.0, %v1160
      %v1162 = vpop.f32.mrb[0].mxu0
      %v1163 = vpop.f32.mrb[0].mxu0
      %v1164 = vadd.f32 0.0, %v1163
      %v1165 = vpop.f32.mrb[0].mxu0
      %1166 = vmatprep.mubr.bf16.mxu0 0
      %1167 = vmatmul.mubr.bf16.gmra.mrb[0].mxu0 %v1079
      %v1168 = vpop.f32.mrb[0].mxu0
      %v1169 = vadd.f32 0.0, %v1168
      %v1170 = vpop.f32.mrb[0].mxu0
      %v1171 = vpop.f32.mrb[0].mxu0
      %v1172 = vadd.f32 0.0, %v1171
      %v1173 = vpop.f32.mrb[0].mxu0
      %1174 = vmatprep.mubr.bf16.mxu0 0
      %1175 = vmatmul.mubr.bf16.gmra.mrb[0].mxu0 %v1082
      %v1176 = vpop.f32.mrb[0].mxu0
      %v1177 = vadd.f32 0.0, %v1176
      %v1178 = vpop.f32.mrb[0].mxu0
      %v1179 = vpop.f32.mrb[0].mxu0
      %v1180 = vadd.f32 0.0, %v1179
      %v1181 = vpop.f32.mrb[0].mxu0
      %1182 = vmatprep.mubr.bf16.mxu0 0
      %1183 = vmatmul.mubr.bf16.gmra.mrb[0].mxu0 %v1085
      %v1184 = vpop.f32.mrb[0].mxu0
      %v1185 = vadd.f32 0.0, %v1184
      %v1186 = vpop.f32.mrb[0].mxu0
      %v1187 = vpop.f32.mrb[0].mxu0
      %v1188 = vadd.f32 0.0, %v1187
      %v1189 = vpop.f32.mrb[0].mxu0
      %1190 = vmatprep.mubr.bf16.mxu0 0
      %1191 = vmatmul.mubr.bf16.gmra.mrb[0].mxu0 %v1088
      %v1192 = vpop.f32.mrb[0].mxu0
      %v1193 = vadd.f32 0.0, %v1192
      %v1194 = vpop.f32.mrb[0].mxu0
      %v1195 = vpop.f32.mrb[0].mxu0
      %v1196 = vadd.f32 0.0, %v1195
      %v1197 = vpop.f32.mrb[0].mxu0
      %1198 = vmatprep.mubr.bf16.mxu0 0
      %1199 = vmatmul.mubr.bf16.gmra.mrb[0].mxu0 %v1091
      %v1200 = vpop.f32.mrb[0].mxu0
      %v1201 = vadd.f32 0.0, %v1200
      %v1202 = vpop.f32.mrb[0].mxu0
      %v1203 = vpop.f32.mrb[0].mxu0
      %v1204 = vadd.f32 0.0, %v1203
      %v1205 = vpop.f32.mrb[0].mxu0
      %1206 = vmatprep.mubr.bf16.mxu0 0
      %1207 = vmatmul.mubr.bf16.gmra.mrb[0].mxu0 %v1094
      %v1208 = vpop.f32.mrb[0].mxu0
      %v1209 = vadd.f32 0.0, %v1208
      %v1210 = vpop.f32.mrb[0].mxu0
      %v1211 = vpop.f32.mrb[0].mxu0
      %v1212 = vadd.f32 0.0, %v1211
      %v1213 = vpop.f32.mrb[0].mxu0
      %1214 = vmatprep.mubr.bf16.mxu0 0
      %1215 = vmatmul.mubr.bf16.gmra.mrb[0].mxu0 %v1097
      %v1216 = vpop.f32.mrb[0].mxu0
      %v1217 = vadd.f32 0.0, %v1216
      %v1218 = vpop.f32.mrb[0].mxu0
      %v1219 = vpop.f32.mrb[0].mxu0
      %v1220 = vadd.f32 0.0, %v1219
      %v1221 = vpop.f32.mrb[0].mxu0
      %1222 = vmatprep.mubr.bf16.mxu0 0
      %1223 = vmatmul.mubr.bf16.gmra.mrb[0].mxu0 %v1100
      %v1224 = vpop.f32.mrb[0].mxu0
      %v1225 = vadd.f32 0.0, %v1224
      %v1226 = vpop.f32.mrb[0].mxu0
      %v1227 = vpop.f32.mrb[0].mxu0
      %v1228 = vadd.f32 0.0, %v1227
      %v1229 = vpop.f32.mrb[0].mxu0
      %1230 = vmatprep.mubr.bf16.mxu0 0
      %1231 = vmatmul.mubr.bf16.gmra.mrb[0].mxu0 %v1103
      %v1232 = vpop.f32.mrb[0].mxu0
      %v1233 = vadd.f32 0.0, %v1232
      %v1234 = vpop.f32.mrb[0].mxu0
      %v1235 = vpop.f32.mrb[0].mxu0
      %v1236 = vadd.f32 0.0, %v1235
      %v1237 = vpop.f32.mrb[0].mxu0
      %1238 = vmatprep.mubr.bf16.mxu0 0
      %1239 = vmatmul.mubr.bf16.gmra.mrb[0].mxu0 %v1106
      %v1240 = vpop.f32.mrb[0].mxu0
      %v1241 = vadd.f32 0.0, %v1240
      %v1242 = vpop.f32.mrb[0].mxu0
      %v1243 = vpop.f32.mrb[0].mxu0
      %v1244 = vadd.f32 0.0, %v1243
      %v1245 = vpop.f32.mrb[0].mxu0
      %1246 = vmatprep.mubr.bf16.mxu0 0
      %1247 = vmatmul.mubr.bf16.gmra.mrb[0].mxu0 %v1109
      %v1248 = vpop.f32.mrb[0].mxu0
      %v1249 = vadd.f32 0.0, %v1248
      %v1250 = vpop.f32.mrb[0].mxu0
      %v1251 = vpop.f32.mrb[0].mxu0
      %v1252 = vadd.f32 0.0, %v1251
      %v1253 = vpop.f32.mrb[0].mxu0
      %1254 = vmatprep.mubr.bf16.mxu0 0
      %1255 = vmatmul.mubr.bf16.gmra.mrb[0].mxu0 %v1112
      %v1256 = vpop.f32.mrb[0].mxu0
      %v1257 = vadd.f32 0.0, %v1256
      %v1258 = vpop.f32.mrb[0].mxu0
      %v1259 = vpop.f32.mrb[0].mxu0
      %v1260 = vadd.f32 0.0, %v1259
      %v1261 = vpop.f32.mrb[0].mxu0
      %1262 = vmatprep.mubr.bf16.mxu0 0
      %1263 = vmatmul.mubr.bf16.gmra.mrb[0].mxu0 %v1115
      %v1264 = vpop.f32.mrb[0].mxu0
      %v1265 = vadd.f32 0.0, %v1264
      %v1266 = vpop.f32.mrb[0].mxu0
      %v1267 = vpop.f32.mrb[0].mxu0
      %v1268 = vadd.f32 0.0, %v1267
      %v1269 = vpop.f32.mrb[0].mxu0
      %1270 = vmatprep.mubr.bf16.mxu0 0
      %1271 = vmatmul.mubr.bf16.gmra.mrb[0].mxu0 %v1118
      %v1272 = vpop.f32.mrb[0].mxu0
      %v1273 = vadd.f32 0.0, %v1272
      %v1274 = vpop.f32.mrb[0].mxu0
      %v1275 = vpop.f32.mrb[0].mxu0
      %v1276 = vadd.f32 0.0, %v1275
      %v1277 = vpop.f32.mrb[0].mxu0
      %1278 = vmatprep.mubr.bf16.mxu0 0
      %1279 = vmatmul.mubr.bf16.gmra.mrb[0].mxu0 %v1121
      %v1280 = vpop.f32.mrb[0].mxu0
      %v1281 = vadd.f32 0.0, %v1280
      %v1282 = vpop.f32.mrb[0].mxu0
      %v1283 = vpop.f32.mrb[0].mxu0
      %v1284 = vadd.f32 0.0, %v1283
      %v1285 = vpop.f32.mrb[0].mxu0
      %1286 = vdwg.mxu0
      %vm1287 = vcmask 64512
      %v1288 = vsel %vm1287, %v1161, -inf
      %1289 = vmax.xlane.f32.xlu0 %v1288
      %v1290 = vpop.xlane.xlu0 %1289
      %v1291 = vsel %vm1287, %v1164, -inf
      %1292 = vmax.xlane.f32.xlu0 %v1291
      %v1293 = vpop.xlane.xlu0 %1292
      %v1294 = vsel %vm1287, %v1169, -inf
      %1295 = vmax.xlane.f32.xlu0 %v1294
      %v1296 = vpop.xlane.xlu0 %1295
      %v1297 = vsel %vm1287, %v1172, -inf
      %1298 = vmax.xlane.f32.xlu0 %v1297
      %v1299 = vpop.xlane.xlu0 %1298
      %v1300 = vsel %vm1287, %v1177, -inf
      %1301 = vmax.xlane.f32.xlu0 %v1300
      %v1302 = vpop.xlane.xlu0 %1301
      %v1303 = vsel %vm1287, %v1180, -inf
      %1304 = vmax.xlane.f32.xlu0 %v1303
      %v1305 = vpop.xlane.xlu0 %1304
      %v1306 = vsel %vm1287, %v1185, -inf
      %1307 = vmax.xlane.f32.xlu0 %v1306
      %v1308 = vpop.xlane.xlu0 %1307
      %v1309 = vsel %vm1287, %v1188, -inf
      %1310 = vmax.xlane.f32.xlu0 %v1309
      %v1311 = vpop.xlane.xlu0 %1310
      %v1312 = vsel %vm1287, %v1193, -inf
      %1313 = vmax.xlane.f32.xlu0 %v1312
      %v1314 = vpop.xlane.xlu0 %1313
      %v1315 = vsel %vm1287, %v1196, -inf
      %1316 = vmax.xlane.f32.xlu0 %v1315
      %v1317 = vpop.xlane.xlu0 %1316
      %v1318 = vsel %vm1287, %v1201, -inf
      %1319 = vmax.xlane.f32.xlu0 %v1318
      %v1320 = vpop.xlane.xlu0 %1319
      %v1321 = vsel %vm1287, %v1204, -inf
      %1322 = vmax.xlane.f32.xlu0 %v1321
      %v1323 = vpop.xlane.xlu0 %1322
      %v1324 = vsel %vm1287, %v1209, -inf
      %1325 = vmax.xlane.f32.xlu0 %v1324
      %v1326 = vpop.xlane.xlu0 %1325
      %v1327 = vsel %vm1287, %v1212, -inf
      %1328 = vmax.xlane.f32.xlu0 %v1327
      %v1329 = vpop.xlane.xlu0 %1328
      %v1330 = vsel %vm1287, %v1217, -inf
      %1331 = vmax.xlane.f32.xlu0 %v1330
      %v1332 = vpop.xlane.xlu0 %1331
      %v1333 = vsel %vm1287, %v1220, -inf
      %1334 = vmax.xlane.f32.xlu0 %v1333
      %v1335 = vpop.xlane.xlu0 %1334
      %v1336 = vsel %vm1287, %v1225, -inf
      %1337 = vmax.xlane.f32.xlu0 %v1336
      %v1338 = vpop.xlane.xlu0 %1337
      %v1339 = vsel %vm1287, %v1228, -inf
      %1340 = vmax.xlane.f32.xlu0 %v1339
      %v1341 = vpop.xlane.xlu0 %1340
      %v1342 = vsel %vm1287, %v1233, -inf
      %1343 = vmax.xlane.f32.xlu0 %v1342
      %v1344 = vpop.xlane.xlu0 %1343
      %v1345 = vsel %vm1287, %v1236, -inf
      %1346 = vmax.xlane.f32.xlu0 %v1345
      %v1347 = vpop.xlane.xlu0 %1346
      %v1348 = vsel %vm1287, %v1241, -inf
      %1349 = vmax.xlane.f32.xlu0 %v1348
      %v1350 = vpop.xlane.xlu0 %1349
      %v1351 = vsel %vm1287, %v1244, -inf
      %1352 = vmax.xlane.f32.xlu0 %v1351
      %v1353 = vpop.xlane.xlu0 %1352
      %v1354 = vsel %vm1287, %v1249, -inf
      %1355 = vmax.xlane.f32.xlu0 %v1354
      %v1356 = vpop.xlane.xlu0 %1355
      %v1357 = vsel %vm1287, %v1252, -inf
      %1358 = vmax.xlane.f32.xlu0 %v1357
      %v1359 = vpop.xlane.xlu0 %1358
      %v1360 = vsel %vm1287, %v1257, -inf
      %1361 = vmax.xlane.f32.xlu0 %v1360
      %v1362 = vpop.xlane.xlu0 %1361
      %v1363 = vsel %vm1287, %v1260, -inf
      %1364 = vmax.xlane.f32.xlu0 %v1363
      %v1365 = vpop.xlane.xlu0 %1364
      %v1366 = vsel %vm1287, %v1265, -inf
      %1367 = vmax.xlane.f32.xlu0 %v1366
      %v1368 = vpop.xlane.xlu0 %1367
      %v1369 = vsel %vm1287, %v1268, -inf
      %1370 = vmax.xlane.f32.xlu0 %v1369
      %v1371 = vpop.xlane.xlu0 %1370
      %v1372 = vsel %vm1287, %v1273, -inf
      %1373 = vmax.xlane.f32.xlu0 %v1372
      %v1374 = vpop.xlane.xlu0 %1373
      %v1375 = vsel %vm1287, %v1276, -inf
      %1376 = vmax.xlane.f32.xlu0 %v1375
      %v1377 = vpop.xlane.xlu0 %1376
      %v1378 = vsel %vm1287, %v1281, -inf
      %1379 = vmax.xlane.f32.xlu0 %v1378
      %v1380 = vpop.xlane.xlu0 %1379
      %v1381 = vsel %vm1287, %v1284, -inf
      %1382 = vmax.xlane.f32.xlu0 %v1381
      %v1383 = vpop.xlane.xlu0 %1382
      %v1384 = vsub.f32 %v1161, %v1290
      %v1385 = vsub.f32 %v1164, %v1293
      %v1386 = vsub.f32 %v1169, %v1296
      %v1387 = vsub.f32 %v1172, %v1299
      %v1388 = vsub.f32 %v1177, %v1302
      %v1389 = vsub.f32 %v1180, %v1305
      %v1390 = vsub.f32 %v1185, %v1308
      %v1391 = vsub.f32 %v1188, %v1311
      %v1392 = vsub.f32 %v1193, %v1314
      %v1393 = vsub.f32 %v1196, %v1317
      %v1394 = vsub.f32 %v1201, %v1320
      %v1395 = vsub.f32 %v1204, %v1323
      %v1396 = vsub.f32 %v1209, %v1326
      %v1397 = vsub.f32 %v1212, %v1329
      %v1398 = vsub.f32 %v1217, %v1332
      %v1399 = vsub.f32 %v1220, %v1335
      %v1400 = vsub.f32 %v1225, %v1338
      %v1401 = vsub.f32 %v1228, %v1341
      %v1402 = vsub.f32 %v1233, %v1344
      %v1403 = vsub.f32 %v1236, %v1347
      %v1404 = vsub.f32 %v1241, %v1350
      %v1405 = vsub.f32 %v1244, %v1353
      %v1406 = vsub.f32 %v1249, %v1356
      %v1407 = vsub.f32 %v1252, %v1359
      %v1408 = vsub.f32 %v1257, %v1362
      %v1409 = vsub.f32 %v1260, %v1365
      %v1410 = vsub.f32 %v1265, %v1368
      %v1411 = vsub.f32 %v1268, %v1371
      %v1412 = vsub.f32 %v1273, %v1374
      %v1413 = vsub.f32 %v1276, %v1377
      %v1414 = vsub.f32 %v1281, %v1380
      %v1415 = vsub.f32 %v1284, %v1383
      %v1416 = vmul.f32 %v1384, 1.442695
      %v1417 = vpow.pop %v1416
      %v1418 = vmul.f32 %v1385, 1.442695
      %v1419 = vpow.pop %v1418
      %v1420 = vmul.f32 %v1386, 1.442695
      %v1421 = vpow.pop %v1420
      %v1422 = vmul.f32 %v1387, 1.442695
      %v1423 = vpow.pop %v1422
      %v1424 = vmul.f32 %v1388, 1.442695
      %v1425 = vpow.pop %v1424
      %v1426 = vmul.f32 %v1389, 1.442695
      %v1427 = vpow.pop %v1426
      %v1428 = vmul.f32 %v1390, 1.442695
      %v1429 = vpow.pop %v1428
      %v1430 = vmul.f32 %v1391, 1.442695
      %v1431 = vpow.pop %v1430
      %v1432 = vmul.f32 %v1392, 1.442695
      %v1433 = vpow.pop %v1432
      %v1434 = vmul.f32 %v1393, 1.442695
      %v1435 = vpow.pop %v1434
      %v1436 = vmul.f32 %v1394, 1.442695
      %v1437 = vpow.pop %v1436
      %v1438 = vmul.f32 %v1395, 1.442695
      %v1439 = vpow.pop %v1438
      %v1440 = vmul.f32 %v1396, 1.442695
      %v1441 = vpow.pop %v1440
      %v1442 = vmul.f32 %v1397, 1.442695
      %v1443 = vpow.pop %v1442
      %v1444 = vmul.f32 %v1398, 1.442695
      %v1445 = vpow.pop %v1444
      %v1446 = vmul.f32 %v1399, 1.442695
      %v1447 = vpow.pop %v1446
      %v1448 = vmul.f32 %v1400, 1.442695
      %v1449 = vpow.pop %v1448
      %v1450 = vmul.f32 %v1401, 1.442695
      %v1451 = vpow.pop %v1450
      %v1452 = vmul.f32 %v1402, 1.442695
      %v1453 = vpow.pop %v1452
      %v1454 = vmul.f32 %v1403, 1.442695
      %v1455 = vpow.pop %v1454
      %v1456 = vmul.f32 %v1404, 1.442695
      %v1457 = vpow.pop %v1456
      %v1458 = vmul.f32 %v1405, 1.442695
      %v1459 = vpow.pop %v1458
      %v1460 = vmul.f32 %v1406, 1.442695
      %v1461 = vpow.pop %v1460
      %v1462 = vmul.f32 %v1407, 1.442695
      %v1463 = vpow.pop %v1462
      %v1464 = vmul.f32 %v1408, 1.442695
      %v1465 = vpow.pop %v1464
      %v1466 = vmul.f32 %v1409, 1.442695
      %v1467 = vpow.pop %v1466
      %v1468 = vmul.f32 %v1410, 1.442695
      %v1469 = vpow.pop %v1468
      %v1470 = vmul.f32 %v1411, 1.442695
      %v1471 = vpow.pop %v1470
      %v1472 = vmul.f32 %v1412, 1.442695
      %v1473 = vpow.pop %v1472
      %v1474 = vmul.f32 %v1413, 1.442695
      %v1475 = vpow.pop %v1474
      %v1476 = vmul.f32 %v1414, 1.442695
      %v1477 = vpow.pop %v1476
      %v1478 = vmul.f32 %v1415, 1.442695
      %v1479 = vpow.pop %v1478
      %v1480 = vsel %vm1287, %v1417, 0.0
      %1481 = vadd.xlane.f32.xlu0 %v1480
      %v1482 = vpop.xlane.xlu0 %1481
      %v1483 = vsel %vm1287, %v1419, 0.0
      %1484 = vadd.xlane.f32.xlu0 %v1483
      %v1485 = vpop.xlane.xlu0 %1484
      %v1486 = vsel %vm1287, %v1421, 0.0
      %1487 = vadd.xlane.f32.xlu0 %v1486
      %v1488 = vpop.xlane.xlu0 %1487
      %v1489 = vsel %vm1287, %v1423, 0.0
      %1490 = vadd.xlane.f32.xlu0 %v1489
      %v1491 = vpop.xlane.xlu0 %1490
      %v1492 = vsel %vm1287, %v1425, 0.0
      %1493 = vadd.xlane.f32.xlu0 %v1492
      %v1494 = vpop.xlane.xlu0 %1493
      %v1495 = vsel %vm1287, %v1427, 0.0
      %1496 = vadd.xlane.f32.xlu0 %v1495
      %v1497 = vpop.xlane.xlu0 %1496
      %v1498 = vsel %vm1287, %v1429, 0.0
      %1499 = vadd.xlane.f32.xlu0 %v1498
      %v1500 = vpop.xlane.xlu0 %1499
      %v1501 = vsel %vm1287, %v1431, 0.0
      %1502 = vadd.xlane.f32.xlu0 %v1501
      %v1503 = vpop.xlane.xlu0 %1502
      %v1504 = vsel %vm1287, %v1433, 0.0
      %1505 = vadd.xlane.f32.xlu0 %v1504
      %v1506 = vpop.xlane.xlu0 %1505
      %v1507 = vsel %vm1287, %v1435, 0.0
      %1508 = vadd.xlane.f32.xlu0 %v1507
      %v1509 = vpop.xlane.xlu0 %1508
      %v1510 = vsel %vm1287, %v1437, 0.0
      %1511 = vadd.xlane.f32.xlu0 %v1510
      %v1512 = vpop.xlane.xlu0 %1511
      %v1513 = vsel %vm1287, %v1439, 0.0
      %1514 = vadd.xlane.f32.xlu0 %v1513
      %v1515 = vpop.xlane.xlu0 %1514
      %v1516 = vsel %vm1287, %v1441, 0.0
      %1517 = vadd.xlane.f32.xlu0 %v1516
      %v1518 = vpop.xlane.xlu0 %1517
      %v1519 = vsel %vm1287, %v1443, 0.0
      %1520 = vadd.xlane.f32.xlu0 %v1519
      %v1521 = vpop.xlane.xlu0 %1520
      %v1522 = vsel %vm1287, %v1445, 0.0
      %1523 = vadd.xlane.f32.xlu0 %v1522
      %v1524 = vpop.xlane.xlu0 %1523
      %v1525 = vsel %vm1287, %v1447, 0.0
      %1526 = vadd.xlane.f32.xlu0 %v1525
      %v1527 = vpop.xlane.xlu0 %1526
      %v1528 = vsel %vm1287, %v1449, 0.0
      %1529 = vadd.xlane.f32.xlu0 %v1528
      %v1530 = vpop.xlane.xlu0 %1529
      %v1531 = vsel %vm1287, %v1451, 0.0
      %1532 = vadd.xlane.f32.xlu0 %v1531
      %v1533 = vpop.xlane.xlu0 %1532
      %v1534 = vsel %vm1287, %v1453, 0.0
      %1535 = vadd.xlane.f32.xlu0 %v1534
      %v1536 = vpop.xlane.xlu0 %1535
      %v1537 = vsel %vm1287, %v1455, 0.0
      %1538 = vadd.xlane.f32.xlu0 %v1537
      %v1539 = vpop.xlane.xlu0 %1538
      %v1540 = vsel %vm1287, %v1457, 0.0
      %1541 = vadd.xlane.f32.xlu0 %v1540
      %v1542 = vpop.xlane.xlu0 %1541
      %v1543 = vsel %vm1287, %v1459, 0.0
      %1544 = vadd.xlane.f32.xlu0 %v1543
      %v1545 = vpop.xlane.xlu0 %1544
      %v1546 = vsel %vm1287, %v1461, 0.0
      %1547 = vadd.xlane.f32.xlu0 %v1546
      %v1548 = vpop.xlane.xlu0 %1547
      %v1549 = vsel %vm1287, %v1463, 0.0
      %1550 = vadd.xlane.f32.xlu0 %v1549
      %v1551 = vpop.xlane.xlu0 %1550
      %v1552 = vsel %vm1287, %v1465, 0.0
      %1553 = vadd.xlane.f32.xlu0 %v1552
      %v1554 = vpop.xlane.xlu0 %1553
      %v1555 = vsel %vm1287, %v1467, 0.0
      %1556 = vadd.xlane.f32.xlu0 %v1555
      %v1557 = vpop.xlane.xlu0 %1556
      %v1558 = vsel %vm1287, %v1469, 0.0
      %1559 = vadd.xlane.f32.xlu0 %v1558
      %v1560 = vpop.xlane.xlu0 %1559
      %v1561 = vsel %vm1287, %v1471, 0.0
      %1562 = vadd.xlane.f32.xlu0 %v1561
      %v1563 = vpop.xlane.xlu0 %1562
      %v1564 = vsel %vm1287, %v1473, 0.0
      %1565 = vadd.xlane.f32.xlu0 %v1564
      %v1566 = vpop.xlane.xlu0 %1565
      %v1567 = vsel %vm1287, %v1475, 0.0
      %1568 = vadd.xlane.f32.xlu0 %v1567
      %v1569 = vpop.xlane.xlu0 %1568
      %v1570 = vsel %vm1287, %v1477, 0.0
      %1571 = vadd.xlane.f32.xlu0 %v1570
      %v1572 = vpop.xlane.xlu0 %1571
      %v1573 = vsel %vm1287, %v1479, 0.0
      %1574 = vadd.xlane.f32.xlu0 %v1573
      %v1575 = vpop.xlane.xlu0 %1574
      %v1576 = vrcp.pop %v1482
      %v1577 = vrcp.pop %v1485
      %v1578 = vrcp.pop %v1488
      %v1579 = vrcp.pop %v1491
      %v1580 = vrcp.pop %v1494
      %v1581 = vrcp.pop %v1497
      %v1582 = vrcp.pop %v1500
      %v1583 = vrcp.pop %v1503
      %v1584 = vrcp.pop %v1506
      %v1585 = vrcp.pop %v1509
      %v1586 = vrcp.pop %v1512
      %v1587 = vrcp.pop %v1515
      %v1588 = vrcp.pop %v1518
      %v1589 = vrcp.pop %v1521
      %v1590 = vrcp.pop %v1524
      %v1591 = vrcp.pop %v1527
      %v1592 = vrcp.pop %v1530
      %v1593 = vrcp.pop %v1533
      %v1594 = vrcp.pop %v1536
      %v1595 = vrcp.pop %v1539
      %v1596 = vrcp.pop %v1542
      %v1597 = vrcp.pop %v1545
      %v1598 = vrcp.pop %v1548
      %v1599 = vrcp.pop %v1551
      %v1600 = vrcp.pop %v1554
      %v1601 = vrcp.pop %v1557
      %v1602 = vrcp.pop %v1560
      %v1603 = vrcp.pop %v1563
      %v1604 = vrcp.pop %v1566
      %v1605 = vrcp.pop %v1569
      %v1606 = vrcp.pop %v1572
      %v1607 = vrcp.pop %v1575
      %v1608 = vmul.f32 %v1417, %v1576
      %v1609 = vmul.f32 %v1419, %v1577
      %v1610 = vmul.f32 %v1421, %v1578
      %v1611 = vmul.f32 %v1423, %v1579
      %v1612 = vmul.f32 %v1425, %v1580
      %v1613 = vmul.f32 %v1427, %v1581
      %v1614 = vmul.f32 %v1429, %v1582
      %v1615 = vmul.f32 %v1431, %v1583
      %v1616 = vmul.f32 %v1433, %v1584
      %v1617 = vmul.f32 %v1435, %v1585
      %v1618 = vmul.f32 %v1437, %v1586
      %v1619 = vmul.f32 %v1439, %v1587
      %v1620 = vmul.f32 %v1441, %v1588
      %v1621 = vmul.f32 %v1443, %v1589
      %v1622 = vmul.f32 %v1445, %v1590
      %v1623 = vmul.f32 %v1447, %v1591
      %v1624 = vmul.f32 %v1449, %v1592
      %v1625 = vmul.f32 %v1451, %v1593
      %v1626 = vmul.f32 %v1453, %v1594
      %v1627 = vmul.f32 %v1455, %v1595
      %v1628 = vmul.f32 %v1457, %v1596
      %v1629 = vmul.f32 %v1459, %v1597
      %v1630 = vmul.f32 %v1461, %v1598
      %v1631 = vmul.f32 %v1463, %v1599
      %v1632 = vmul.f32 %v1465, %v1600
      %v1633 = vmul.f32 %v1467, %v1601
      %v1634 = vmul.f32 %v1469, %v1602
      %v1635 = vmul.f32 %v1471, %v1603
      %v1636 = vmul.f32 %v1473, %v1604
      %v1637 = vmul.f32 %v1475, %v1605
      %v1638 = vmul.f32 %v1477, %v1606
      %v1639 = vmul.f32 %v1479, %v1607
      %v1640 = vpack.c.bf16 %v1609, %v1608
      %v1641 = vpack.c.bf16 %v1611, %v1610
      %v1642 = vpack.c.bf16 %v1613, %v1612
      %v1643 = vpack.c.bf16 %v1615, %v1614
      %v1644 = vpack.c.bf16 %v1617, %v1616
      %v1645 = vpack.c.bf16 %v1619, %v1618
      %v1646 = vpack.c.bf16 %v1621, %v1620
      %v1647 = vpack.c.bf16 %v1623, %v1622
      %v1648 = vpack.c.bf16 %v1625, %v1624
      %v1649 = vpack.c.bf16 %v1627, %v1626
      %v1650 = vpack.c.bf16 %v1629, %v1628
      %v1651 = vpack.c.bf16 %v1631, %v1630
      %v1652 = vpack.c.bf16 %v1633, %v1632
      %v1653 = vpack.c.bf16 %v1635, %v1634
      %v1654 = vpack.c.bf16 %v1637, %v1636
      %v1655 = vpack.c.bf16 %v1639, %v1638
      %v1657 = vsel %vm1287, %v1640, 0
      %v1660 = vsel %vm1287, %v1641, 0
      %v1663 = vsel %vm1287, %v1642, 0
      %v1666 = vsel %vm1287, %v1643, 0
      %v1669 = vsel %vm1287, %v1644, 0
      %v1672 = vsel %vm1287, %v1645, 0
      %v1675 = vsel %vm1287, %v1646, 0
      %v1678 = vsel %vm1287, %v1647, 0
      %v1681 = vsel %vm1287, %v1648, 0
      %v1684 = vsel %vm1287, %v1649, 0
      %v1687 = vsel %vm1287, %v1650, 0
      %v1690 = vsel %vm1287, %v1651, 0
      %v1693 = vsel %vm1287, %v1652, 0
      %v1696 = vsel %vm1287, %v1653, 0
      %v1699 = vsel %vm1287, %v1654, 0
      %v1702 = vsel %vm1287, %v1655, 0
      %vm1704 = vcmask 1043456
      %v1706 = vsel %vm1704, %v440, 0
      %1708 = vmatprep.subr.bf16.mxu0 0
      %1709 = vmatpush1.bf16.msra.mxu0 %v1706
      %1710 = vmatprep.subr.bf16.mxu0 0
      %1711 = vmatpush1.bf16.msra.mxu0 0
      %1712 = vmatprep.subr.bf16.mxu0 0
      %1713 = vmatpush1.bf16.msra.mxu0 0
      %1714 = vmatprep.subr.bf16.mxu0 0
      %1715 = vmatpush1.bf16.msra.mxu0 0
      %1716 = vmatprep.subr.bf16.mxu0 0
      %1717 = vmatpush1.bf16.msra.mxu0 0
      %1718 = vmatprep.subr.bf16.mxu0 0
      %1719 = vmatpush1.bf16.msra.mxu0 0
      %1720 = vmatprep.subr.bf16.mxu0 0
      %1721 = vmatpush1.bf16.msra.mxu0 0
      %1722 = vmatprep.subr.bf16.mxu0 0
      %1723 = vmatpush1.bf16.msra.mxu0 0
      %1724 = vmatprep.subr.bf16.mxu0 0
      %1725 = vmatpush1.bf16.msra.mxu0 0
      %1726 = vmatprep.subr.bf16.mxu0 0
      %1727 = vmatpush1.bf16.msra.mxu0 0
      %1728 = vmatprep.subr.bf16.mxu0 0
      %1729 = vmatpush1.bf16.msra.mxu0 0
      %1730 = vmatprep.subr.bf16.mxu0 0
      %1731 = vmatpush1.bf16.msra.mxu0 0
      %1732 = vmatprep.subr.bf16.mxu0 0
      %1733 = vmatpush1.bf16.msra.mxu0 0
      %1734 = vmatprep.subr.bf16.mxu0 0
      %1735 = vmatpush1.bf16.msra.mxu0 0
      %1736 = vmatprep.subr.bf16.mxu0 0
      %1737 = vmatpush1.bf16.msra.mxu0 0
      %1738 = vmatprep.subr.bf16.mxu0 0
      %1739 = vmatpush1.bf16.msra.mxu0 0
      %1740 = vmatprep.mubr.bf16.mxu0 0
      %1741 = vmatmul.mubr.bf16.gmra.mrb[0].mxu0 %v1657
      %v1742 = vpop.f32.mrb[0].mxu0
      %v1743 = vadd.f32 0.0, %v1742
      %v1744 = vpop.f32.mrb[0].mxu0
      %v1745 = vpop.f32.mrb[0].mxu0
      %v1746 = vadd.f32 0.0, %v1745
      %v1747 = vpop.f32.mrb[0].mxu0
      %1748 = vmatprep.mubr.bf16.mxu0 0
      %1749 = vmatmul.mubr.bf16.gmra.mrb[0].mxu0 %v1660
      %v1750 = vpop.f32.mrb[0].mxu0
      %v1751 = vadd.f32 0.0, %v1750
      %v1752 = vpop.f32.mrb[0].mxu0
      %v1753 = vpop.f32.mrb[0].mxu0
      %v1754 = vadd.f32 0.0, %v1753
      %v1755 = vpop.f32.mrb[0].mxu0
      %1756 = vmatprep.mubr.bf16.mxu0 0
      %1757 = vmatmul.mubr.bf16.gmra.mrb[0].mxu0 %v1663
      %v1758 = vpop.f32.mrb[0].mxu0
      %v1759 = vadd.f32 0.0, %v1758
      %v1760 = vpop.f32.mrb[0].mxu0
      %v1761 = vpop.f32.mrb[0].mxu0
      %v1762 = vadd.f32 0.0, %v1761
      %v1763 = vpop.f32.mrb[0].mxu0
      %1764 = vmatprep.mubr.bf16.mxu0 0
      %1765 = vmatmul.mubr.bf16.gmra.mrb[0].mxu0 %v1666
      %v1766 = vpop.f32.mrb[0].mxu0
      %v1767 = vadd.f32 0.0, %v1766
      %v1768 = vpop.f32.mrb[0].mxu0
      %v1769 = vpop.f32.mrb[0].mxu0
      %v1770 = vadd.f32 0.0, %v1769
      %v1771 = vpop.f32.mrb[0].mxu0
      %1772 = vmatprep.mubr.bf16.mxu0 0
      %1773 = vmatmul.mubr.bf16.gmra.mrb[0].mxu0 %v1669
      %v1774 = vpop.f32.mrb[0].mxu0
      %v1775 = vadd.f32 0.0, %v1774
      %v1776 = vpop.f32.mrb[0].mxu0
      %v1777 = vpop.f32.mrb[0].mxu0
      %v1778 = vadd.f32 0.0, %v1777
      %v1779 = vpop.f32.mrb[0].mxu0
      %1780 = vmatprep.mubr.bf16.mxu0 0
      %1781 = vmatmul.mubr.bf16.gmra.mrb[0].mxu0 %v1672
      %v1782 = vpop.f32.mrb[0].mxu0
      %v1783 = vadd.f32 0.0, %v1782
      %v1784 = vpop.f32.mrb[0].mxu0
      %v1785 = vpop.f32.mrb[0].mxu0
      %v1786 = vadd.f32 0.0, %v1785
      %v1787 = vpop.f32.mrb[0].mxu0
      %1788 = vmatprep.mubr.bf16.mxu0 0
      %1789 = vmatmul.mubr.bf16.gmra.mrb[0].mxu0 %v1675
      %v1790 = vpop.f32.mrb[0].mxu0
      %v1791 = vadd.f32 0.0, %v1790
      %v1792 = vpop.f32.mrb[0].mxu0
      %v1793 = vpop.f32.mrb[0].mxu0
      %v1794 = vadd.f32 0.0, %v1793
      %v1795 = vpop.f32.mrb[0].mxu0
      %1796 = vmatprep.mubr.bf16.mxu0 0
      %1797 = vmatmul.mubr.bf16.gmra.mrb[0].mxu0 %v1678
      %v1798 = vpop.f32.mrb[0].mxu0
      %v1799 = vadd.f32 0.0, %v1798
      %v1800 = vpop.f32.mrb[0].mxu0
      %v1801 = vpop.f32.mrb[0].mxu0
      %v1802 = vadd.f32 0.0, %v1801
      %v1803 = vpop.f32.mrb[0].mxu0
      %1804 = vmatprep.mubr.bf16.mxu0 0
      %1805 = vmatmul.mubr.bf16.gmra.mrb[0].mxu0 %v1681
      %v1806 = vpop.f32.mrb[0].mxu0
      %v1807 = vadd.f32 0.0, %v1806
      %v1808 = vpop.f32.mrb[0].mxu0
      %v1809 = vpop.f32.mrb[0].mxu0
      %v1810 = vadd.f32 0.0, %v1809
      %v1811 = vpop.f32.mrb[0].mxu0
      %1812 = vmatprep.mubr.bf16.mxu0 0
      %1813 = vmatmul.mubr.bf16.gmra.mrb[0].mxu0 %v1684
      %v1814 = vpop.f32.mrb[0].mxu0
      %v1815 = vadd.f32 0.0, %v1814
      %v1816 = vpop.f32.mrb[0].mxu0
      %v1817 = vpop.f32.mrb[0].mxu0
      %v1818 = vadd.f32 0.0, %v1817
      %v1819 = vpop.f32.mrb[0].mxu0
      %1820 = vmatprep.mubr.bf16.mxu0 0
      %1821 = vmatmul.mubr.bf16.gmra.mrb[0].mxu0 %v1687
      %v1822 = vpop.f32.mrb[0].mxu0
      %v1823 = vadd.f32 0.0, %v1822
      %v1824 = vpop.f32.mrb[0].mxu0
      %v1825 = vpop.f32.mrb[0].mxu0
      %v1826 = vadd.f32 0.0, %v1825
      %v1827 = vpop.f32.mrb[0].mxu0
      %1828 = vmatprep.mubr.bf16.mxu0 0
      %1829 = vmatmul.mubr.bf16.gmra.mrb[0].mxu0 %v1690
      %v1830 = vpop.f32.mrb[0].mxu0
      %v1831 = vadd.f32 0.0, %v1830
      %v1832 = vpop.f32.mrb[0].mxu0
      %v1833 = vpop.f32.mrb[0].mxu0
      %v1834 = vadd.f32 0.0, %v1833
      %v1835 = vpop.f32.mrb[0].mxu0
      %1836 = vmatprep.mubr.bf16.mxu0 0
      %1837 = vmatmul.mubr.bf16.gmra.mrb[0].mxu0 %v1693
      %v1838 = vpop.f32.mrb[0].mxu0
      %v1839 = vadd.f32 0.0, %v1838
      %v1840 = vpop.f32.mrb[0].mxu0
      %v1841 = vpop.f32.mrb[0].mxu0
      %v1842 = vadd.f32 0.0, %v1841
      %v1843 = vpop.f32.mrb[0].mxu0
      %1844 = vmatprep.mubr.bf16.mxu0 0
      %1845 = vmatmul.mubr.bf16.gmra.mrb[0].mxu0 %v1696
      %v1846 = vpop.f32.mrb[0].mxu0
      %v1847 = vadd.f32 0.0, %v1846
      %v1848 = vpop.f32.mrb[0].mxu0
      %v1849 = vpop.f32.mrb[0].mxu0
      %v1850 = vadd.f32 0.0, %v1849
      %v1851 = vpop.f32.mrb[0].mxu0
      %1852 = vmatprep.mubr.bf16.mxu0 0
      %1853 = vmatmul.mubr.bf16.gmra.mrb[0].mxu0 %v1699
      %v1854 = vpop.f32.mrb[0].mxu0
      %v1855 = vadd.f32 0.0, %v1854
      %v1856 = vpop.f32.mrb[0].mxu0
      %v1857 = vpop.f32.mrb[0].mxu0
      %v1858 = vadd.f32 0.0, %v1857
      %v1859 = vpop.f32.mrb[0].mxu0
      %1860 = vmatprep.mubr.bf16.mxu0 0
      %1861 = vmatmul.mubr.bf16.gmra.mrb[0].mxu0 %v1702
      %v1862 = vpop.f32.mrb[0].mxu0
      %v1863 = vadd.f32 0.0, %v1862
      %v1864 = vpop.f32.mrb[0].mxu0
      %v1865 = vpop.f32.mrb[0].mxu0
      %v1866 = vadd.f32 0.0, %v1865
      %v1867 = vpop.f32.mrb[0].mxu0
      %1868 = vdwg.mxu0
      %v1869 = vpack.c.bf16 %v1746, %v1743
      %v1870 = vpack.c.bf16 %v1754, %v1751
      %v1871 = vpack.c.bf16 %v1762, %v1759
      %v1872 = vpack.c.bf16 %v1770, %v1767
      %v1873 = vpack.c.bf16 %v1778, %v1775
      %v1874 = vpack.c.bf16 %v1786, %v1783
      %v1875 = vpack.c.bf16 %v1794, %v1791
      %v1876 = vpack.c.bf16 %v1802, %v1799
      %v1877 = vpack.c.bf16 %v1810, %v1807
      %v1878 = vpack.c.bf16 %v1818, %v1815
      %v1879 = vpack.c.bf16 %v1826, %v1823
      %v1880 = vpack.c.bf16 %v1834, %v1831
      %v1881 = vpack.c.bf16 %v1842, %v1839
      %v1882 = vpack.c.bf16 %v1850, %v1847
      %v1883 = vpack.c.bf16 %v1858, %v1855
      %v1884 = vpack.c.bf16 %v1866, %v1863
      %v1885 = vld [vmem:[%s7] sm:$0xf]
      %v1886 = vld [vmem:[%s7 + $0x4] sm:$0xf]
      %v1887 = vld [vmem:[%s7 + $0x8] sm:$0xf]
      %v1888 = vld [vmem:[%s7 + $0xc] sm:$0xf]
      %v1889 = vld [vmem:[%s8] sm:$0x1]
      %v1891 = vlaneseq
      %v1892 = vshrl.u32 %v1891, 7
      %v1893 = vsub.s32 0, %v1892
      %v1894 = vrot.slane %v1889, %v1893
      %v1900 = vunpack.c.l.b16 %v1885
      %v1901 = vunpack.c.l.b16 %v1886
      %v1902 = vunpack.c.l.b16 %v1887
      %v1903 = vunpack.c.l.b16 %v1888
      %v1904 = vpack.c.b16 %v1901, %v1900
      %v1905 = vpack.c.b16 %v1903, %v1902
      %v1909 = vsel %vm817, %v1869, 0
      %v1912 = vsel %vm817, %v1870, 0
      %v1915 = vsel %vm817, %v1871, 0
      %v1918 = vsel %vm817, %v1872, 0
      %v1921 = vsel %vm817, %v1873, 0
      %v1924 = vsel %vm817, %v1874, 0
      %v1927 = vsel %vm817, %v1875, 0
      %v1930 = vsel %vm817, %v1876, 0
      %v1933 = vsel %vm817, %v1877, 0
      %v1936 = vsel %vm817, %v1878, 0
      %v1939 = vsel %vm817, %v1879, 0
      %v1942 = vsel %vm817, %v1880, 0
      %v1945 = vsel %vm817, %v1881, 0
      %v1948 = vsel %vm817, %v1882, 0
      %v1951 = vsel %vm817, %v1883, 0
      %v1954 = vsel %vm817, %v1884, 0
      %1956 = vmatprep.subr.bf16.mxu0 0
      %1957 = vmatpush1.bf16.msra.mxu0 %v1904
      %1958 = vmatprep.subr.bf16.mxu0 0
      %1959 = vmatpush1.bf16.msra.mxu0 %v1905
      %1960 = vmatprep.subr.bf16.mxu0 0
      %1961 = vmatpush1.bf16.msra.mxu0 0
      %1962 = vmatprep.subr.bf16.mxu0 0
      %1963 = vmatpush1.bf16.msra.mxu0 0
      %1964 = vmatprep.subr.bf16.mxu0 0
      %1965 = vmatpush1.bf16.msra.mxu0 0
      %1966 = vmatprep.subr.bf16.mxu0 0
      %1967 = vmatpush1.bf16.msra.mxu0 0
      %1968 = vmatprep.subr.bf16.mxu0 0
      %1969 = vmatpush1.bf16.msra.mxu0 0
      %1970 = vmatprep.subr.bf16.mxu0 0
      %1971 = vmatpush1.bf16.msra.mxu0 0
      %1972 = vmatprep.subr.bf16.mxu0 0
      %1973 = vmatpush1.bf16.msra.mxu0 0
      %1974 = vmatprep.subr.bf16.mxu0 0
      %1975 = vmatpush1.bf16.msra.mxu0 0
      %1976 = vmatprep.subr.bf16.mxu0 0
      %1977 = vmatpush1.bf16.msra.mxu0 0
      %1978 = vmatprep.subr.bf16.mxu0 0
      %1979 = vmatpush1.bf16.msra.mxu0 0
      %1980 = vmatprep.subr.bf16.mxu0 0
      %1981 = vmatpush1.bf16.msra.mxu0 0
      %1982 = vmatprep.subr.bf16.mxu0 0
      %1983 = vmatpush1.bf16.msra.mxu0 0
      %1984 = vmatprep.subr.bf16.mxu0 0
      %1985 = vmatpush1.bf16.msra.mxu0 0
      %1986 = vmatprep.subr.bf16.mxu0 0
      %1987 = vmatpush1.bf16.msra.mxu0 0
      %1988 = vmatprep.mubr.bf16.mxu0 0
      %1989 = vmatmul.mubr.bf16.gmra.mrb[0].mxu0 %v1909
      %v1990 = vpop.f32.mrb[0].mxu0
      %v1991 = vadd.f32 %v1894, %v1990
      %v1992 = vpop.f32.mrb[0].mxu0
      %v1993 = vpop.f32.mrb[0].mxu0
      %v1994 = vadd.f32 %v1894, %v1993
      %v1995 = vpop.f32.mrb[0].mxu0
      %1996 = vmatprep.mubr.bf16.mxu0 0
      %1997 = vmatmul.mubr.bf16.gmra.mrb[0].mxu0 %v1912
      %v1998 = vpop.f32.mrb[0].mxu0
      %v1999 = vadd.f32 %v1894, %v1998
      %v2000 = vpop.f32.mrb[0].mxu0
      %v2001 = vpop.f32.mrb[0].mxu0
      %v2002 = vadd.f32 %v1894, %v2001
      %v2003 = vpop.f32.mrb[0].mxu0
      %2004 = vmatprep.mubr.bf16.mxu0 0
      %2005 = vmatmul.mubr.bf16.gmra.mrb[0].mxu0 %v1915
      %v2006 = vpop.f32.mrb[0].mxu0
      %v2007 = vadd.f32 %v1894, %v2006
      %v2008 = vpop.f32.mrb[0].mxu0
      %v2009 = vpop.f32.mrb[0].mxu0
      %v2010 = vadd.f32 %v1894, %v2009
      %v2011 = vpop.f32.mrb[0].mxu0
      %2012 = vmatprep.mubr.bf16.mxu0 0
      %2013 = vmatmul.mubr.bf16.gmra.mrb[0].mxu0 %v1918
      %v2014 = vpop.f32.mrb[0].mxu0
      %v2015 = vadd.f32 %v1894, %v2014
      %v2016 = vpop.f32.mrb[0].mxu0
      %v2017 = vpop.f32.mrb[0].mxu0
      %v2018 = vadd.f32 %v1894, %v2017
      %v2019 = vpop.f32.mrb[0].mxu0
      %2020 = vmatprep.mubr.bf16.mxu0 0
      %2021 = vmatmul.mubr.bf16.gmra.mrb[0].mxu0 %v1921
      %v2022 = vpop.f32.mrb[0].mxu0
      %v2023 = vadd.f32 %v1894, %v2022
      %v2024 = vpop.f32.mrb[0].mxu0
      %v2025 = vpop.f32.mrb[0].mxu0
      %v2026 = vadd.f32 %v1894, %v2025
      %v2027 = vpop.f32.mrb[0].mxu0
      %2028 = vmatprep.mubr.bf16.mxu0 0
      %2029 = vmatmul.mubr.bf16.gmra.mrb[0].mxu0 %v1924
      %v2030 = vpop.f32.mrb[0].mxu0
      %v2031 = vadd.f32 %v1894, %v2030
      %v2032 = vpop.f32.mrb[0].mxu0
      %v2033 = vpop.f32.mrb[0].mxu0
      %v2034 = vadd.f32 %v1894, %v2033
      %v2035 = vpop.f32.mrb[0].mxu0
      %2036 = vmatprep.mubr.bf16.mxu0 0
      %2037 = vmatmul.mubr.bf16.gmra.mrb[0].mxu0 %v1927
      %v2038 = vpop.f32.mrb[0].mxu0
      %v2039 = vadd.f32 %v1894, %v2038
      %v2040 = vpop.f32.mrb[0].mxu0
      %v2041 = vpop.f32.mrb[0].mxu0
      %v2042 = vadd.f32 %v1894, %v2041
      %v2043 = vpop.f32.mrb[0].mxu0
      %2044 = vmatprep.mubr.bf16.mxu0 0
      %2045 = vmatmul.mubr.bf16.gmra.mrb[0].mxu0 %v1930
      %v2046 = vpop.f32.mrb[0].mxu0
      %v2047 = vadd.f32 %v1894, %v2046
      %v2048 = vpop.f32.mrb[0].mxu0
      %v2049 = vpop.f32.mrb[0].mxu0
      %v2050 = vadd.f32 %v1894, %v2049
      %v2051 = vpop.f32.mrb[0].mxu0
      %2052 = vmatprep.mubr.bf16.mxu0 0
      %2053 = vmatmul.mubr.bf16.gmra.mrb[0].mxu0 %v1933
      %v2054 = vpop.f32.mrb[0].mxu0
      %v2055 = vadd.f32 %v1894, %v2054
      %v2056 = vpop.f32.mrb[0].mxu0
      %v2057 = vpop.f32.mrb[0].mxu0
      %v2058 = vadd.f32 %v1894, %v2057
      %v2059 = vpop.f32.mrb[0].mxu0
      %2060 = vmatprep.mubr.bf16.mxu0 0
      %2061 = vmatmul.mubr.bf16.gmra.mrb[0].mxu0 %v1936
      %v2062 = vpop.f32.mrb[0].mxu0
      %v2063 = vadd.f32 %v1894, %v2062
      %v2064 = vpop.f32.mrb[0].mxu0
      %v2065 = vpop.f32.mrb[0].mxu0
      %v2066 = vadd.f32 %v1894, %v2065
      %v2067 = vpop.f32.mrb[0].mxu0
      %2068 = vmatprep.mubr.bf16.mxu0 0
      %2069 = vmatmul.mubr.bf16.gmra.mrb[0].mxu0 %v1939
      %v2070 = vpop.f32.mrb[0].mxu0
      %v2071 = vadd.f32 %v1894, %v2070
      %v2072 = vpop.f32.mrb[0].mxu0
      %v2073 = vpop.f32.mrb[0].mxu0
      %v2074 = vadd.f32 %v1894, %v2073
      %v2075 = vpop.f32.mrb[0].mxu0
      %2076 = vmatprep.mubr.bf16.mxu0 0
      %2077 = vmatmul.mubr.bf16.gmra.mrb[0].mxu0 %v1942
      %v2078 = vpop.f32.mrb[0].mxu0
      %v2079 = vadd.f32 %v1894, %v2078
      %v2080 = vpop.f32.mrb[0].mxu0
      %v2081 = vpop.f32.mrb[0].mxu0
      %v2082 = vadd.f32 %v1894, %v2081
      %v2083 = vpop.f32.mrb[0].mxu0
      %2084 = vmatprep.mubr.bf16.mxu0 0
      %2085 = vmatmul.mubr.bf16.gmra.mrb[0].mxu0 %v1945
      %v2086 = vpop.f32.mrb[0].mxu0
      %v2087 = vadd.f32 %v1894, %v2086
      %v2088 = vpop.f32.mrb[0].mxu0
      %v2089 = vpop.f32.mrb[0].mxu0
      %v2090 = vadd.f32 %v1894, %v2089
      %v2091 = vpop.f32.mrb[0].mxu0
      %2092 = vmatprep.mubr.bf16.mxu0 0
      %2093 = vmatmul.mubr.bf16.gmra.mrb[0].mxu0 %v1948
      %v2094 = vpop.f32.mrb[0].mxu0
      %v2095 = vadd.f32 %v1894, %v2094
      %v2096 = vpop.f32.mrb[0].mxu0
      %v2097 = vpop.f32.mrb[0].mxu0
      %v2098 = vadd.f32 %v1894, %v2097
      %v2099 = vpop.f32.mrb[0].mxu0
      %2100 = vmatprep.mubr.bf16.mxu0 0
      %2101 = vmatmul.mubr.bf16.gmra.mrb[0].mxu0 %v1951
      %v2102 = vpop.f32.mrb[0].mxu0
      %v2103 = vadd.f32 %v1894, %v2102
      %v2104 = vpop.f32.mrb[0].mxu0
      %v2105 = vpop.f32.mrb[0].mxu0
      %v2106 = vadd.f32 %v1894, %v2105
      %v2107 = vpop.f32.mrb[0].mxu0
      %2108 = vmatprep.mubr.bf16.mxu0 0
      %2109 = vmatmul.mubr.bf16.gmra.mrb[0].mxu0 %v1954
      %v2110 = vpop.f32.mrb[0].mxu0
      %v2111 = vadd.f32 %v1894, %v2110
      %v2112 = vpop.f32.mrb[0].mxu0
      %v2113 = vpop.f32.mrb[0].mxu0
      %v2114 = vadd.f32 %v1894, %v2113
      %v2115 = vpop.f32.mrb[0].mxu0
      %2116 = vdwg.mxu0
      %v2117 = vmax.f32 %v1991, 0.0
      %v2118 = vmax.f32 %v1994, 0.0
      %v2119 = vmax.f32 %v1999, 0.0
      %v2120 = vmax.f32 %v2002, 0.0
      %v2121 = vmax.f32 %v2007, 0.0
      %v2122 = vmax.f32 %v2010, 0.0
      %v2123 = vmax.f32 %v2015, 0.0
      %v2124 = vmax.f32 %v2018, 0.0
      %v2125 = vmax.f32 %v2023, 0.0
      %v2126 = vmax.f32 %v2026, 0.0
      %v2127 = vmax.f32 %v2031, 0.0
      %v2128 = vmax.f32 %v2034, 0.0
      %v2129 = vmax.f32 %v2039, 0.0
      %v2130 = vmax.f32 %v2042, 0.0
      %v2131 = vmax.f32 %v2047, 0.0
      %v2132 = vmax.f32 %v2050, 0.0
      %v2133 = vmax.f32 %v2055, 0.0
      %v2134 = vmax.f32 %v2058, 0.0
      %v2135 = vmax.f32 %v2063, 0.0
      %v2136 = vmax.f32 %v2066, 0.0
      %v2137 = vmax.f32 %v2071, 0.0
      %v2138 = vmax.f32 %v2074, 0.0
      %v2139 = vmax.f32 %v2079, 0.0
      %v2140 = vmax.f32 %v2082, 0.0
      %v2141 = vmax.f32 %v2087, 0.0
      %v2142 = vmax.f32 %v2090, 0.0
      %v2143 = vmax.f32 %v2095, 0.0
      %v2144 = vmax.f32 %v2098, 0.0
      %v2145 = vmax.f32 %v2103, 0.0
      %v2146 = vmax.f32 %v2106, 0.0
      %v2147 = vmax.f32 %v2111, 0.0
      %v2148 = vmax.f32 %v2114, 0.0
      %v2149 = vpack.c.bf16 %v2118, %v2117
      %v2150 = vpack.c.bf16 %v2120, %v2119
      %v2151 = vpack.c.bf16 %v2122, %v2121
      %v2152 = vpack.c.bf16 %v2124, %v2123
      %v2153 = vpack.c.bf16 %v2126, %v2125
      %v2154 = vpack.c.bf16 %v2128, %v2127
      %v2155 = vpack.c.bf16 %v2130, %v2129
      %v2156 = vpack.c.bf16 %v2132, %v2131
      %v2157 = vpack.c.bf16 %v2134, %v2133
      %v2158 = vpack.c.bf16 %v2136, %v2135
      %v2159 = vpack.c.bf16 %v2138, %v2137
      %v2160 = vpack.c.bf16 %v2140, %v2139
      %v2161 = vpack.c.bf16 %v2142, %v2141
      %v2162 = vpack.c.bf16 %v2144, %v2143
      %v2163 = vpack.c.bf16 %v2146, %v2145
      %v2164 = vpack.c.bf16 %v2148, %v2147
      %v2181 = vunpack.c.l.b16 %v2149
      %v2182 = vunpack.c.h.b16 %v2149
      %v2183 = vunpack.c.l.b16 %v2150
      %v2184 = vunpack.c.h.b16 %v2150
      %v2185 = vunpack.c.l.b16 %v2151
      %v2186 = vunpack.c.h.b16 %v2151
      %v2187 = vunpack.c.l.b16 %v2152
      %v2188 = vunpack.c.h.b16 %v2152
      %v2189 = vunpack.c.l.b16 %v2153
      %v2190 = vunpack.c.h.b16 %v2153
      %v2191 = vunpack.c.l.b16 %v2154
      %v2192 = vunpack.c.h.b16 %v2154
      %v2193 = vunpack.c.l.b16 %v2155
      %v2194 = vunpack.c.h.b16 %v2155
      %v2195 = vunpack.c.l.b16 %v2156
      %v2196 = vunpack.c.h.b16 %v2156
      %v2197 = vunpack.c.l.b16 %v2157
      %v2198 = vunpack.c.h.b16 %v2157
      %v2199 = vunpack.c.l.b16 %v2158
      %v2200 = vunpack.c.h.b16 %v2158
      %v2201 = vunpack.c.l.b16 %v2159
      %v2202 = vunpack.c.h.b16 %v2159
      %v2203 = vunpack.c.l.b16 %v2160
      %v2204 = vunpack.c.h.b16 %v2160
      %v2205 = vunpack.c.l.b16 %v2161
      %v2206 = vunpack.c.h.b16 %v2161
      %v2207 = vunpack.c.l.b16 %v2162
      %v2208 = vunpack.c.h.b16 %v2162
      %v2209 = vunpack.c.l.b16 %v2163
      %v2210 = vunpack.c.h.b16 %v2163
      %v2211 = vunpack.c.l.b16 %v2164
      %v2212 = vunpack.c.h.b16 %v2164
      %v2213 = vpack.c.b16 %v2181, %v2181
      %v2214 = vpack.c.b16 %v2182, %v2182
      %v2215 = vpack.c.b16 %v2183, %v2183
      %v2216 = vpack.c.b16 %v2184, %v2184
      %v2217 = vpack.c.b16 %v2185, %v2185
      %v2218 = vpack.c.b16 %v2186, %v2186
      %v2219 = vpack.c.b16 %v2187, %v2187
      %v2220 = vpack.c.b16 %v2188, %v2188
      %v2221 = vpack.c.b16 %v2189, %v2189
      %v2222 = vpack.c.b16 %v2190, %v2190
      %v2223 = vpack.c.b16 %v2191, %v2191
      %v2224 = vpack.c.b16 %v2192, %v2192
      %v2225 = vpack.c.b16 %v2193, %v2193
      %v2226 = vpack.c.b16 %v2194, %v2194
      %v2227 = vpack.c.b16 %v2195, %v2195
      %v2228 = vpack.c.b16 %v2196, %v2196
      %v2229 = vpack.c.b16 %v2197, %v2197
      %v2230 = vpack.c.b16 %v2198, %v2198
      %v2231 = vpack.c.b16 %v2199, %v2199
      %v2232 = vpack.c.b16 %v2200, %v2200
      %v2233 = vpack.c.b16 %v2201, %v2201
      %v2234 = vpack.c.b16 %v2202, %v2202
      %v2235 = vpack.c.b16 %v2203, %v2203
      %v2236 = vpack.c.b16 %v2204, %v2204
      %v2237 = vpack.c.b16 %v2205, %v2205
      %v2238 = vpack.c.b16 %v2206, %v2206
      %v2239 = vpack.c.b16 %v2207, %v2207
      %v2240 = vpack.c.b16 %v2208, %v2208
      %v2241 = vpack.c.b16 %v2209, %v2209
      %v2242 = vpack.c.b16 %v2210, %v2210
      %v2243 = vpack.c.b16 %v2211, %v2211
      %v2244 = vpack.c.b16 %v2212, %v2212
      %vm2277 = vcmask 125952
      %2278 = vst.msk [vmem:[%s404] sm:$0xf] %vm2277, %v2213
      %2279 = vst.msk [vmem:[%s404 + $0x4] sm:$0xf] %vm2277, %v2214
      %2280 = vst.msk [vmem:[%s404 + $0x8] sm:$0xf] %vm2277, %v2215
      %2281 = vst.msk [vmem:[%s404 + $0xc] sm:$0xf] %vm2277, %v2216
      %2282 = vst.msk [vmem:[%s404 + $0x10] sm:$0xf] %vm2277, %v2217
      %2283 = vst.msk [vmem:[%s404 + $0x14] sm:$0xf] %vm2277, %v2218
      %2284 = vst.msk [vmem:[%s404 + $0x18] sm:$0xf] %vm2277, %v2219
      %2285 = vst.msk [vmem:[%s404 + $0x1c] sm:$0xf] %vm2277, %v2220
      %2286 = vst.msk [vmem:[%s404 + $0x20] sm:$0xf] %vm2277, %v2221
      %2287 = vst.msk [vmem:[%s404 + $0x24] sm:$0xf] %vm2277, %v2222
      %2288 = vst.msk [vmem:[%s404 + $0x28] sm:$0xf] %vm2277, %v2223
      %2289 = vst.msk [vmem:[%s404 + $0x2c] sm:$0xf] %vm2277, %v2224
      %2290 = vst.msk [vmem:[%s404 + $0x30] sm:$0xf] %vm2277, %v2225
      %2291 = vst.msk [vmem:[%s404 + $0x34] sm:$0xf] %vm2277, %v2226
      %2292 = vst.msk [vmem:[%s404 + $0x38] sm:$0xf] %vm2277, %v2227
      %2293 = vst.msk [vmem:[%s404 + $0x3c] sm:$0xf] %vm2277, %v2228
      %2294 = vst.msk [vmem:[%s404 + $0x40] sm:$0xf] %vm2277, %v2229
      %2295 = vst.msk [vmem:[%s404 + $0x44] sm:$0xf] %vm2277, %v2230
      %2296 = vst.msk [vmem:[%s404 + $0x48] sm:$0xf] %vm2277, %v2231
      %2297 = vst.msk [vmem:[%s404 + $0x4c] sm:$0xf] %vm2277, %v2232
      %2298 = vst.msk [vmem:[%s404 + $0x50] sm:$0xf] %vm2277, %v2233
      %2299 = vst.msk [vmem:[%s404 + $0x54] sm:$0xf] %vm2277, %v2234
      %2300 = vst.msk [vmem:[%s404 + $0x58] sm:$0xf] %vm2277, %v2235
      %2301 = vst.msk [vmem:[%s404 + $0x5c] sm:$0xf] %vm2277, %v2236
      %2302 = vst.msk [vmem:[%s404 + $0x60] sm:$0xf] %vm2277, %v2237
      %2303 = vst.msk [vmem:[%s404 + $0x64] sm:$0xf] %vm2277, %v2238
      %2304 = vst.msk [vmem:[%s404 + $0x68] sm:$0xf] %vm2277, %v2239
      %2305 = vst.msk [vmem:[%s404 + $0x6c] sm:$0xf] %vm2277, %v2240
      %2306 = vst.msk [vmem:[%s404 + $0x70] sm:$0xf] %vm2277, %v2241
      %2307 = vst.msk [vmem:[%s404 + $0x74] sm:$0xf] %vm2277, %v2242
      %2308 = vst.msk [vmem:[%s404 + $0x78] sm:$0xf] %vm2277, %v2243
      %2309 = vst.msk [vmem:[%s404 + $0x7c] sm:$0xf] %vm2277, %v2244
      %s2310 = smul.u32 32, %s25
      %p2311 = scmp.lt.s32.totalorder %s24, 1
      %s2312 = scalar_select %p2311, %s24, 1
      %p2313 = scmp.lt.s32.totalorder %s2310, 31
      %s2314 = scalar_select %p2313, %s2310, 31
      %s2315 = smul.addr %s2312, 32
      %s2316 = sadd.s32 %s2314, %s2315
      %s2317 = smul.addr %s2316, 4
      %s2318 = scalar_lea.vmem %s9, %s2317
      // Predicated region
      $region57: #{tpu_custom_call.1} parent=55 // pred_check
        %p2319 = pneg %p258
      $region58: #{tpu_custom_call.1} parent=55 // pred_check_branch
        %2321 = sbr.rel (%p2319) target = $region60
      $region59: #{tpu_custom_call.1} parent=55 // pred_region
        %s2322 = smul.u32 32, %s25
      $region60: #{tpu_custom_call.1} parent=55 // pred_fallthru
        _
    $region56: #{tpu_custom_call.1} parent=5 // pred_fallthru
      _
    %p2323 = scmp.le.s32.totalorder 2, %s15
    // Predicated region
    $region61: #{tpu_custom_call.1} parent=5 // pred_check
      %p2324 = pneg %p2323
    $region62: #{tpu_custom_call.1} parent=5 // pred_check_branch
      %2326 = sbr.rel (%p2324) target = $region64
    $region63: #{tpu_custom_call.1} parent=5 // pred_region
      %s2327 = ssub.s32 %s15, 2
      // Predicated region
      $region65: #{tpu_custom_call.1} parent=63 // pred_check
        %p2328 = pneg %p264
      $region66: #{tpu_custom_call.1} parent=63 // pred_check_branch
        %2330 = sbr.rel (%p2328) target = $region68
      $region67: #{tpu_custom_call.1} parent=63 // pred_region
        %s2331 = smul.u32 32, %s27
        %p2332 = scmp.lt.s32.totalorder %s26, 1
        %s2333 = scalar_select %p2332, %s26, 1
        %p2334 = scmp.lt.s32.totalorder %s2331, 31
        %s2335 = scalar_select %p2334, %s2331, 31
        %s2336 = smul.addr %s2333, 32
        %s2337 = sadd.s32 %s2335, %s2336
        %s2338 = smul.addr %s2337, 4
        %s2339 = scalar_lea.vmem %s9, %s2338
      $region68: #{tpu_custom_call.1} parent=63 // pred_fallthru
        _
    $region64: #{tpu_custom_call.1} parent=5 // pred_fallthru
      _
  $region6: #{tpu_custom_call.1} parent=0 // loop_footer
    %s19 = sadd.s32 1, %s15
  $region7: #{tpu_custom_call.1} parent=0 // loop_footer_branch
    %14 = sbr.rel target = $region3
  $region8: #{tpu_custom_call.1} parent=0 // loop_exit
    _

</llo_original>
